<compile_context>
chip_gen: v7x
topology: tpu7x:2x2x1
jax: 0.10.0
libtpu: 0.0.40
codegen_flags: <defaults>
</compile_context>

<pallas_src>
import functools

import jax
import jax.numpy as jnp
from jax import lax
from jax.experimental import pallas as pl
from jax.experimental.pallas import tpu as pltpu


def _round_up(x, m):
    return (x + m - 1) // m * m


def _lstm_mean_kernel(x_ref, wih_ref, whh_ref, b_ref, o_ref,
                      gx_sc, h_sc, c_sc, acc_sc, *,
                      tt, bp, hp, seq_len, mask_tail, unroll):
    """One time-chunk of the LSTM recurrence (grid axis = time chunks, serial).

    x_ref:   (tt*bp, D)    time-major rows [t*bp + b] for this chunk (MXU dtype)
    wih_ref: (D,  4*hp)    input->gate weights, gate order [i|f|o|g], H padded
    whh_ref: (hp, 4*hp)    hidden->gate weights, same layout
    b_ref:   (1,  4*hp)    b_ih + b_hh, same layout, f32
    o_ref:   (bp, hp)      mean over time of hidden states (written on last chunk)
    gx_sc:   (tt*bp, 4*hp) f32 scratch: hoisted input projection for the chunk
    h_sc/c_sc/acc_sc: (bp, hp) f32 state persisting across chunks.
    """
    chunk = pl.program_id(0)
    n_chunks = pl.num_programs(0)

    @pl.when(chunk == 0)
    def _init():
        h_sc[...] = jnp.zeros_like(h_sc)
        c_sc[...] = jnp.zeros_like(c_sc)
        acc_sc[...] = jnp.zeros_like(acc_sc)

    # Hoisted input projection: ONE MXU matmul for the whole chunk instead of
    # tt tiny matmuls on the serial critical path; bias folded in here.
    gx_sc[...] = (
        jnp.dot(x_ref[...], wih_ref[...], preferred_element_type=jnp.float32)
        + b_ref[...])

    whh = whh_ref[...]            # stays resident for the whole chunk
    t0 = chunk * tt               # global index of this chunk's first timestep

    def step(i, carry):
        h, c, acc = carry
        row = pl.multiple_of(i * bp, bp)
        gx_t = gx_sc[pl.ds(row, bp), :]                        # (bp, 4hp) f32
        gates = gx_t + jnp.dot(h.astype(whh.dtype), whh,
                               preferred_element_type=jnp.float32)
        # Gate layout [i | f | o | g]: one contiguous sigmoid, one tanh.
        ifo = jax.nn.sigmoid(gates[:, :3 * hp])
        i_g = ifo[:, 0 * hp:1 * hp]
        f_g = ifo[:, 1 * hp:2 * hp]
        o_g = ifo[:, 2 * hp:3 * hp]
        g_g = jnp.tanh(gates[:, 3 * hp:])
        c = f_g * c + i_g * g_g
        h = o_g * jnp.tanh(c)
        if mask_tail:
            acc = acc + jnp.where(t0 + i < seq_len, h, 0.0)
        else:
            acc = acc + h
        return h, c, acc

    carry0 = (h_sc[...], c_sc[...], acc_sc[...])
    h, c, acc = lax.fori_loop(0, tt, step, carry0, unroll=unroll)
    h_sc[...] = h
    c_sc[...] = c
    acc_sc[...] = acc

    @pl.when(chunk == n_chunks - 1)
    def _finish():
        o_ref[...] = (acc_sc[...] * (1.0 / seq_len)).astype(o_ref.dtype)


def lstm_mean_step(x, w_ih, w_hh, b_ih, b_hh, *,
                   time_tile=32, mxu_dtype=jnp.bfloat16):
    """LSTMMeanStep forward: x (B, T, D) -> (B, 1, H). PyTorch gate order i,f,g,o."""
    B, T, D = x.shape
    H = w_hh.shape[1]
    assert w_ih.shape == (4 * H, D)
    assert w_hh.shape == (4 * H, H)
    assert b_ih.shape == (4 * H,) and b_hh.shape == (4 * H,)

    Bp = _round_up(B, 8)          # sublane alignment
    Hp = _round_up(H, 128)        # lane alignment -> full-vreg gate slices
    Tt = min(T, time_tile)
    n_chunks = pl.cdiv(T, Tt)
    Tpad = n_chunks * Tt

    # Weights: transpose to (in, 4H), permute gates (i,f,g,o)->(i,f,o,g),
    # zero-pad H->Hp per gate (and Whh's input rows H->Hp). Zero padding is
    # exact: padded gate columns keep h == 0 forever and are sliced off.
    def prep_w(w, row_pad):
        wt = jnp.transpose(w).astype(jnp.float32)              # (in, 4H)
        gi, gf, gg, go = jnp.split(wt, 4, axis=1)
        blocks = [jnp.pad(blk, ((0, row_pad), (0, Hp - H)))
                  for blk in (gi, gf, go, gg)]
        return jnp.concatenate(blocks, axis=1).astype(mxu_dtype)

    wih_p = prep_w(w_ih, 0)                                     # (D,  4Hp)
    whh_p = prep_w(w_hh, Hp - H)                                 # (Hp, 4Hp)

    bias = (b_ih + b_hh).astype(jnp.float32)
    bi, bf, bg, bo = jnp.split(bias, 4)
    bias_p = jnp.concatenate(
        [jnp.pad(b, (0, Hp - H)) for b in (bi, bf, bo, bg)]).reshape(1, 4 * Hp)

    # x: pad batch/time, go time-major and flatten to 2D (row = t*Bp + b) so the
    # per-chunk input projection is a single contiguous GEMM and per-step rows
    # are contiguous, aligned slices of the gx scratch.
    xp = jnp.pad(x.astype(jnp.float32), ((0, Bp - B), (0, Tpad - T), (0, 0)))
    x2d = jnp.transpose(xp, (1, 0, 2)).reshape(Tpad * Bp, D).astype(mxu_dtype)

    ebytes = jnp.dtype(mxu_dtype).itemsize
    est = (2 * Tt * Bp * D * ebytes                  # x chunk (double-buffered)
           + 2 * (D + Hp) * 4 * Hp * ebytes          # weights
           + 2 * 4 * Hp * 4                          # bias
           + Tt * Bp * 4 * Hp * 4                    # gates_x scratch
           + 3 * Bp * Hp * 4                         # h / c / running sum
           + 2 * Bp * Hp * 4)                        # output block
    vmem_limit = int(min(48 * 2**20, max(16 * 2**20, 2 * est)))

    kernel = functools.partial(
        _lstm_mean_kernel, tt=Tt, bp=Bp, hp=Hp, seq_len=T,
        mask_tail=(Tpad != T), unroll=(Tt if Tt <= 8 else 4))

    out_pad = pl.pallas_call(
        kernel,
        out_shape=jax.ShapeDtypeStruct((Bp, Hp), jnp.float32),
        grid=(n_chunks,),
        in_specs=[
            pl.BlockSpec((Tt * Bp, D), lambda t: (t, 0)),       # stream time chunks
            pl.BlockSpec((D, 4 * Hp), lambda t: (0, 0)),        # Wih (resident)
            pl.BlockSpec((Hp, 4 * Hp), lambda t: (0, 0)),       # Whh (resident)
            pl.BlockSpec((1, 4 * Hp), lambda t: (0, 0)),        # bias (resident)
        ],
        out_specs=pl.BlockSpec((Bp, Hp), lambda t: (0, 0)),
        scratch_shapes=[
            pltpu.VMEM((Tt * Bp, 4 * Hp), jnp.float32),   # hoisted gates_x chunk
            pltpu.VMEM((Bp, Hp), jnp.float32),            # h
            pltpu.VMEM((Bp, Hp), jnp.float32),            # c
            pltpu.VMEM((Bp, Hp), jnp.float32),            # running sum over time
        ],
        compiler_params=pltpu.CompilerParams(
            dimension_semantics=("arbitrary",),
            vmem_limit_bytes=vmem_limit),
    )(x2d, wih_p, whh_p, bias_p)

    return out_pad[:B, :H][:, None, :]                    # (B, 1, H)


def lstm_mean_step_ref(x, w_ih, w_hh, b_ih, b_hh, mxu_dtype=None):
    """Pure-JAX reference (torch.nn.LSTM + mean(dim=1).unsqueeze(1)).

    If mxu_dtype is given, matmul operands are quantized to it (mirroring the
    kernel's MXU dtype) so the comparison isolates kernel correctness.
    """
    B, T, D = x.shape
    H = w_hh.shape[1]

    def cast(a):
        a = a.astype(jnp.float32)
        if mxu_dtype is not None:
            a = a.astype(mxu_dtype).astype(jnp.float32)
        return a

    xq, wih, whh = cast(x), cast(w_ih), cast(w_hh)
    b = (b_ih + b_hh).astype(jnp.float32)
    h = jnp.zeros((B, H), jnp.float32)
    c = jnp.zeros((B, H), jnp.float32)
    acc = jnp.zeros((B, H), jnp.float32)
    for t in range(T):
        gates = xq[:, t] @ wih.T + cast(h) @ whh.T + b
        i_g, f_g, g_g, o_g = jnp.split(gates, 4, axis=1)
        i_g, f_g, o_g = (jax.nn.sigmoid(i_g), jax.nn.sigmoid(f_g),
                         jax.nn.sigmoid(o_g))
        g_g = jnp.tanh(g_g)
        c = f_g * c + i_g * g_g
        h = o_g * jnp.tanh(c)
        acc = acc + h
    return (acc / T)[:, None, :]                           # (B, 1, H)


if __name__ == "__main__":
    B, T, D, H = 2, 8, 4, 32

    key = jax.random.PRNGKey(0)
    k_x, k_wih, k_whh, k_bih, k_bhh = jax.random.split(key, 5)

    # Deterministic "PyTorch-style" LSTM init: U(-1/sqrt(H), 1/sqrt(H)).
    bound = 1.0 / float(H) ** 0.5
    x = jax.random.normal(k_x, (B, T, D), dtype=jnp.float32)
    w_ih = jax.random.uniform(k_wih, (4 * H, D), jnp.float32, -bound, bound)
    w_hh = jax.random.uniform(k_whh, (4 * H, H), jnp.float32, -bound, bound)
    b_ih = jax.random.uniform(k_bih, (4 * H,), jnp.float32, -bound, bound)
    b_hh = jax.random.uniform(k_bhh, (4 * H,), jnp.float32, -bound, bound)

    out = lstm_mean_step(x, w_ih, w_hh, b_ih, b_hh)
    out = jax.block_until_ready(out)
    assert out.shape == (B, 1, H), out.shape

    # Strict check vs. a reference with the same (bf16) matmul operand dtype.
    ref_bf16 = lstm_mean_step_ref(x, w_ih, w_hh, b_ih, b_hh,
                                  mxu_dtype=jnp.bfloat16)
    assert jnp.allclose(out, ref_bf16, atol=1e-3, rtol=1e-3), (
        float(jnp.max(jnp.abs(out - ref_bf16))))

    # Loose check vs. the full-f32 reference (bf16 quantization error only).
    ref_f32 = lstm_mean_step_ref(x, w_ih, w_hh, b_ih, b_hh)
    assert jnp.allclose(out, ref_f32, atol=5e-2, rtol=5e-2), (
        float(jnp.max(jnp.abs(out - ref_f32))))

    print("KERNEL_OK")
</pallas_src>

<mosaic_0001>
module attributes {stable_mosaic.version = 11 : i64} {
  func.func @_lstm_mean_kernel(%arg0: i32, %arg1: memref<64x4xbf16, #tpu.memory_space<vmem>>, %arg2: memref<4x512xbf16, #tpu.memory_space<vmem>>, %arg3: memref<128x512xbf16, #tpu.memory_space<vmem>>, %arg4: memref<1x512xf32, #tpu.memory_space<vmem>>, %arg5: memref<8x128xf32, #tpu.memory_space<vmem>>, %arg6: memref<64x512xf32, #tpu.memory_space<vmem>>, %arg7: memref<8x128xf32, #tpu.memory_space<vmem>>, %arg8: memref<8x128xf32, #tpu.memory_space<vmem>>, %arg9: memref<8x128xf32, #tpu.memory_space<vmem>>) attributes {dimension_semantics = [#tpu.dimension_semantics<arbitrary>], iteration_bounds = array<i64: 1>, scalar_prefetch = 0 : i64, scratch_operands = 4 : i64, tpu.core_type = #tpu.core_type<tc>, window_params = [{transform_indices = @transform_0, window_bounds = array<i64: 64, 4>}, {pipeline_mode = #tpu.pipeline_mode<synchronous>, transform_indices = @transform_1, window_bounds = array<i64: 4, 512>}, {pipeline_mode = #tpu.pipeline_mode<synchronous>, transform_indices = @transform_2, window_bounds = array<i64: 128, 512>}, {pipeline_mode = #tpu.pipeline_mode<synchronous>, transform_indices = @transform_3, window_bounds = array<i64: 1, 512>}, {pipeline_mode = #tpu.pipeline_mode<synchronous>, transform_indices = @transform_4, window_bounds = array<i64: 8, 128>}]} {
    %c0_i32 = arith.constant 0 : i32
    %0 = arith.cmpi eq, %arg0, %c0_i32 : i32
    %1 = arith.extui %0 : i1 to i32
    %c0_i32_0 = arith.constant 0 : i32
    %2 = arith.cmpi ne, %1, %c0_i32_0 : i32
    scf.if %2 {
      %cst_57 = arith.constant 0.000000e+00 : f32
      %212 = vector.broadcast %cst_57 : f32 to vector<8x128xf32>
      %c0_58 = arith.constant 0 : index
      %c0_59 = arith.constant 0 : index
      %213 = vector.load %arg7[%c0_58, %c0_59] : memref<8x128xf32, #tpu.memory_space<vmem>>, vector<8x128xf32>
      tpu.vector_store %arg7[%c0_58, %c0_59], %212 {strides = array<i32>} : memref<8x128xf32, #tpu.memory_space<vmem>>, vector<8x128xf32>,
      %cst_60 = arith.constant 0.000000e+00 : f32
      %214 = vector.broadcast %cst_60 : f32 to vector<8x128xf32>
      %c0_61 = arith.constant 0 : index
      %c0_62 = arith.constant 0 : index
      %215 = vector.load %arg8[%c0_61, %c0_62] : memref<8x128xf32, #tpu.memory_space<vmem>>, vector<8x128xf32>
      tpu.vector_store %arg8[%c0_61, %c0_62], %214 {strides = array<i32>} : memref<8x128xf32, #tpu.memory_space<vmem>>, vector<8x128xf32>,
      %cst_63 = arith.constant 0.000000e+00 : f32
      %216 = vector.broadcast %cst_63 : f32 to vector<8x128xf32>
      %c0_64 = arith.constant 0 : index
      %c0_65 = arith.constant 0 : index
      %217 = vector.load %arg9[%c0_64, %c0_65] : memref<8x128xf32, #tpu.memory_space<vmem>>, vector<8x128xf32>
      tpu.vector_store %arg9[%c0_64, %c0_65], %216 {strides = array<i32>} : memref<8x128xf32, #tpu.memory_space<vmem>>, vector<8x128xf32>,
    } else {
    }
    %c0 = arith.constant 0 : index
    %c0_1 = arith.constant 0 : index
    %3 = vector.load %arg1[%c0, %c0_1] : memref<64x4xbf16, #tpu.memory_space<vmem>>, vector<64x4xbf16>
    %c0_2 = arith.constant 0 : index
    %c0_3 = arith.constant 0 : index
    %4 = vector.load %arg2[%c0_2, %c0_3] : memref<4x512xbf16, #tpu.memory_space<vmem>>, vector<4x512xbf16>
    %cst = arith.constant dense<0.000000e+00> : vector<64x512xf32>
    %5 = tpu.matmul %3, %4, %cst {dimension_numbers = #tpu.dot_dimension_numbers<[1], [0], [0], [1], [0, 0, 1, 1], [], []>} : vector<64x4xbf16>, vector<4x512xbf16>, vector<64x512xf32> -> vector<64x512xf32>
    %c0_4 = arith.constant 0 : index
    %c0_5 = arith.constant 0 : index
    %6 = vector.load %arg4[%c0_4, %c0_5] : memref<1x512xf32, #tpu.memory_space<vmem>>, vector<1x512xf32>
    %7 = vector.broadcast %6 : vector<1x512xf32> to vector<64x512xf32>
    %8 = arith.addf %5, %7 : vector<64x512xf32>
    %c0_6 = arith.constant 0 : index
    %c0_7 = arith.constant 0 : index
    %9 = vector.load %arg6[%c0_6, %c0_7] : memref<64x512xf32, #tpu.memory_space<vmem>>, vector<64x512xf32>
    tpu.vector_store %arg6[%c0_6, %c0_7], %8 {strides = array<i32>} : memref<64x512xf32, #tpu.memory_space<vmem>>, vector<64x512xf32>,
    %c0_8 = arith.constant 0 : index
    %c0_9 = arith.constant 0 : index
    %10 = vector.load %arg3[%c0_8, %c0_9] : memref<128x512xbf16, #tpu.memory_space<vmem>>, vector<128x512xbf16>
    %c0_10 = arith.constant 0 : index
    %c0_11 = arith.constant 0 : index
    %11 = vector.load %arg7[%c0_10, %c0_11] : memref<8x128xf32, #tpu.memory_space<vmem>>, vector<8x128xf32>
    %c0_12 = arith.constant 0 : index
    %c0_13 = arith.constant 0 : index
    %12 = vector.load %arg8[%c0_12, %c0_13] : memref<8x128xf32, #tpu.memory_space<vmem>>, vector<8x128xf32>
    %c0_14 = arith.constant 0 : index
    %c0_15 = arith.constant 0 : index
    %13 = vector.load %arg9[%c0_14, %c0_15] : memref<8x128xf32, #tpu.memory_space<vmem>>, vector<8x128xf32>
    %c0_i32_16 = arith.constant 0 : i32
    %c8_i32 = arith.constant 8 : i32
    %14 = arith.muli %c0_i32_16, %c8_i32 : i32
    %15 = tpu.assume_multiple %14, 8 : i32
    %16 = arith.index_cast %15 : i32 to index
    %c0_17 = arith.constant 0 : index
    %17 = vector.load %arg6[%16, %c0_17] : memref<64x512xf32, #tpu.memory_space<vmem>>, vector<8x512xf32>
    %18 = arith.truncf %11 : vector<8x128xf32> to vector<8x128xbf16>
    %cst_18 = arith.constant dense<0.000000e+00> : vector<8x512xf32>
    %19 = tpu.matmul %18, %10, %cst_18 {dimension_numbers = #tpu.dot_dimension_numbers<[1], [0], [0], [1], [0, 0, 1, 1], [], []>} : vector<8x128xbf16>, vector<128x512xbf16>, vector<8x512xf32> -> vector<8x512xf32>
    %20 = arith.addf %17, %19 : vector<8x512xf32>
    %21 = vector.extract_strided_slice %20 {offsets = [0, 0], sizes = [8, 384], strides = [1, 1]} : vector<8x512xf32> to vector<8x384xf32>
    %22 = arith.negf %21 : vector<8x384xf32>
    %23 = math.exp %22 : vector<8x384xf32>
    %cst_19 = arith.constant 1.000000e+00 : f32
    %24 = vector.broadcast %cst_19 : f32 to vector<8x384xf32>
    %25 = arith.addf %24, %23 : vector<8x384xf32>
    %26 = arith.divf %24, %25 : vector<8x384xf32>
    %27 = vector.extract_strided_slice %26 {offsets = [0, 0], sizes = [8, 128], strides = [1, 1]} : vector<8x384xf32> to vector<8x128xf32>
    %28 = vector.extract_strided_slice %26 {offsets = [0, 128], sizes = [8, 128], strides = [1, 1]} : vector<8x384xf32> to vector<8x128xf32>
    %29 = vector.extract_strided_slice %26 {offsets = [0, 256], sizes = [8, 128], strides = [1, 1]} : vector<8x384xf32> to vector<8x128xf32>
    %30 = vector.extract_strided_slice %20 {offsets = [0, 384], sizes = [8, 128], strides = [1, 1]} : vector<8x512xf32> to vector<8x128xf32>
    %31 = math.tanh %30 : vector<8x128xf32>
    %32 = arith.mulf %28, %12 : vector<8x128xf32>
    %33 = arith.mulf %27, %31 : vector<8x128xf32>
    %34 = arith.addf %32, %33 : vector<8x128xf32>
    %35 = math.tanh %34 : vector<8x128xf32>
    %36 = arith.mulf %29, %35 : vector<8x128xf32>
    %37 = arith.addf %13, %36 : vector<8x128xf32>
    %c1_i32 = arith.constant 1 : i32
    %c8_i32_20 = arith.constant 8 : i32
    %38 = arith.muli %c1_i32, %c8_i32_20 : i32
    %39 = tpu.assume_multiple %38, 8 : i32
    %40 = arith.index_cast %39 : i32 to index
    %c0_21 = arith.constant 0 : index
    %41 = vector.load %arg6[%40, %c0_21] : memref<64x512xf32, #tpu.memory_space<vmem>>, vector<8x512xf32>
    %42 = arith.truncf %36 : vector<8x128xf32> to vector<8x128xbf16>
    %cst_22 = arith.constant dense<0.000000e+00> : vector<8x512xf32>
    %43 = tpu.matmul %42, %10, %cst_22 {dimension_numbers = #tpu.dot_dimension_numbers<[1], [0], [0], [1], [0, 0, 1, 1], [], []>} : vector<8x128xbf16>, vector<128x512xbf16>, vector<8x512xf32> -> vector<8x512xf32>
    %44 = arith.addf %41, %43 : vector<8x512xf32>
    %45 = vector.extract_strided_slice %44 {offsets = [0, 0], sizes = [8, 384], strides = [1, 1]} : vector<8x512xf32> to vector<8x384xf32>
    %46 = arith.negf %45 : vector<8x384xf32>
    %47 = math.exp %46 : vector<8x384xf32>
    %cst_23 = arith.constant 1.000000e+00 : f32
    %48 = vector.broadcast %cst_23 : f32 to vector<8x384xf32>
    %49 = arith.addf %48, %47 : vector<8x384xf32>
    %50 = arith.divf %48, %49 : vector<8x384xf32>
    %51 = vector.extract_strided_slice %50 {offsets = [0, 0], sizes = [8, 128], strides = [1, 1]} : vector<8x384xf32> to vector<8x128xf32>
    %52 = vector.extract_strided_slice %50 {offsets = [0, 128], sizes = [8, 128], strides = [1, 1]} : vector<8x384xf32> to vector<8x128xf32>
    %53 = vector.extract_strided_slice %50 {offsets = [0, 256], sizes = [8, 128], strides = [1, 1]} : vector<8x384xf32> to vector<8x128xf32>
    %54 = vector.extract_strided_slice %44 {offsets = [0, 384], sizes = [8, 128], strides = [1, 1]} : vector<8x512xf32> to vector<8x128xf32>
    %55 = math.tanh %54 : vector<8x128xf32>
    %56 = arith.mulf %52, %34 : vector<8x128xf32>
    %57 = arith.mulf %51, %55 : vector<8x128xf32>
    %58 = arith.addf %56, %57 : vector<8x128xf32>
    %59 = math.tanh %58 : vector<8x128xf32>
    %60 = arith.mulf %53, %59 : vector<8x128xf32>
    %61 = arith.addf %37, %60 : vector<8x128xf32>
    %c2_i32 = arith.constant 2 : i32
    %c8_i32_24 = arith.constant 8 : i32
    %62 = arith.muli %c2_i32, %c8_i32_24 : i32
    %63 = tpu.assume_multiple %62, 8 : i32
    %64 = arith.index_cast %63 : i32 to index
    %c0_25 = arith.constant 0 : index
    %65 = vector.load %arg6[%64, %c0_25] : memref<64x512xf32, #tpu.memory_space<vmem>>, vector<8x512xf32>
    %66 = arith.truncf %60 : vector<8x128xf32> to vector<8x128xbf16>
    %cst_26 = arith.constant dense<0.000000e+00> : vector<8x512xf32>
    %67 = tpu.matmul %66, %10, %cst_26 {dimension_numbers = #tpu.dot_dimension_numbers<[1], [0], [0], [1], [0, 0, 1, 1], [], []>} : vector<8x128xbf16>, vector<128x512xbf16>, vector<8x512xf32> -> vector<8x512xf32>
    %68 = arith.addf %65, %67 : vector<8x512xf32>
    %69 = vector.extract_strided_slice %68 {offsets = [0, 0], sizes = [8, 384], strides = [1, 1]} : vector<8x512xf32> to vector<8x384xf32>
    %70 = arith.negf %69 : vector<8x384xf32>
    %71 = math.exp %70 : vector<8x384xf32>
    %cst_27 = arith.constant 1.000000e+00 : f32
    %72 = vector.broadcast %cst_27 : f32 to vector<8x384xf32>
    %73 = arith.addf %72, %71 : vector<8x384xf32>
    %74 = arith.divf %72, %73 : vector<8x384xf32>
    %75 = vector.extract_strided_slice %74 {offsets = [0, 0], sizes = [8, 128], strides = [1, 1]} : vector<8x384xf32> to vector<8x128xf32>
    %76 = vector.extract_strided_slice %74 {offsets = [0, 128], sizes = [8, 128], strides = [1, 1]} : vector<8x384xf32> to vector<8x128xf32>
    %77 = vector.extract_strided_slice %74 {offsets = [0, 256], sizes = [8, 128], strides = [1, 1]} : vector<8x384xf32> to vector<8x128xf32>
    %78 = vector.extract_strided_slice %68 {offsets = [0, 384], sizes = [8, 128], strides = [1, 1]} : vector<8x512xf32> to vector<8x128xf32>
    %79 = math.tanh %78 : vector<8x128xf32>
    %80 = arith.mulf %76, %58 : vector<8x128xf32>
    %81 = arith.mulf %75, %79 : vector<8x128xf32>
    %82 = arith.addf %80, %81 : vector<8x128xf32>
    %83 = math.tanh %82 : vector<8x128xf32>
    %84 = arith.mulf %77, %83 : vector<8x128xf32>
    %85 = arith.addf %61, %84 : vector<8x128xf32>
    %c3_i32 = arith.constant 3 : i32
    %c8_i32_28 = arith.constant 8 : i32
    %86 = arith.muli %c3_i32, %c8_i32_28 : i32
    %87 = tpu.assume_multiple %86, 8 : i32
    %88 = arith.index_cast %87 : i32 to index
    %c0_29 = arith.constant 0 : index
    %89 = vector.load %arg6[%88, %c0_29] : memref<64x512xf32, #tpu.memory_space<vmem>>, vector<8x512xf32>
    %90 = arith.truncf %84 : vector<8x128xf32> to vector<8x128xbf16>
    %cst_30 = arith.constant dense<0.000000e+00> : vector<8x512xf32>
    %91 = tpu.matmul %90, %10, %cst_30 {dimension_numbers = #tpu.dot_dimension_numbers<[1], [0], [0], [1], [0, 0, 1, 1], [], []>} : vector<8x128xbf16>, vector<128x512xbf16>, vector<8x512xf32> -> vector<8x512xf32>
    %92 = arith.addf %89, %91 : vector<8x512xf32>
    %93 = vector.extract_strided_slice %92 {offsets = [0, 0], sizes = [8, 384], strides = [1, 1]} : vector<8x512xf32> to vector<8x384xf32>
    %94 = arith.negf %93 : vector<8x384xf32>
    %95 = math.exp %94 : vector<8x384xf32>
    %cst_31 = arith.constant 1.000000e+00 : f32
    %96 = vector.broadcast %cst_31 : f32 to vector<8x384xf32>
    %97 = arith.addf %96, %95 : vector<8x384xf32>
    %98 = arith.divf %96, %97 : vector<8x384xf32>
    %99 = vector.extract_strided_slice %98 {offsets = [0, 0], sizes = [8, 128], strides = [1, 1]} : vector<8x384xf32> to vector<8x128xf32>
    %100 = vector.extract_strided_slice %98 {offsets = [0, 128], sizes = [8, 128], strides = [1, 1]} : vector<8x384xf32> to vector<8x128xf32>
    %101 = vector.extract_strided_slice %98 {offsets = [0, 256], sizes = [8, 128], strides = [1, 1]} : vector<8x384xf32> to vector<8x128xf32>
    %102 = vector.extract_strided_slice %92 {offsets = [0, 384], sizes = [8, 128], strides = [1, 1]} : vector<8x512xf32> to vector<8x128xf32>
    %103 = math.tanh %102 : vector<8x128xf32>
    %104 = arith.mulf %100, %82 : vector<8x128xf32>
    %105 = arith.mulf %99, %103 : vector<8x128xf32>
    %106 = arith.addf %104, %105 : vector<8x128xf32>
    %107 = math.tanh %106 : vector<8x128xf32>
    %108 = arith.mulf %101, %107 : vector<8x128xf32>
    %109 = arith.addf %85, %108 : vector<8x128xf32>
    %c4_i32 = arith.constant 4 : i32
    %c8_i32_32 = arith.constant 8 : i32
    %110 = arith.muli %c4_i32, %c8_i32_32 : i32
    %111 = tpu.assume_multiple %110, 8 : i32
    %112 = arith.index_cast %111 : i32 to index
    %c0_33 = arith.constant 0 : index
    %113 = vector.load %arg6[%112, %c0_33] : memref<64x512xf32, #tpu.memory_space<vmem>>, vector<8x512xf32>
    %114 = arith.truncf %108 : vector<8x128xf32> to vector<8x128xbf16>
    %cst_34 = arith.constant dense<0.000000e+00> : vector<8x512xf32>
    %115 = tpu.matmul %114, %10, %cst_34 {dimension_numbers = #tpu.dot_dimension_numbers<[1], [0], [0], [1], [0, 0, 1, 1], [], []>} : vector<8x128xbf16>, vector<128x512xbf16>, vector<8x512xf32> -> vector<8x512xf32>
    %116 = arith.addf %113, %115 : vector<8x512xf32>
    %117 = vector.extract_strided_slice %116 {offsets = [0, 0], sizes = [8, 384], strides = [1, 1]} : vector<8x512xf32> to vector<8x384xf32>
    %118 = arith.negf %117 : vector<8x384xf32>
    %119 = math.exp %118 : vector<8x384xf32>
    %cst_35 = arith.constant 1.000000e+00 : f32
    %120 = vector.broadcast %cst_35 : f32 to vector<8x384xf32>
    %121 = arith.addf %120, %119 : vector<8x384xf32>
    %122 = arith.divf %120, %121 : vector<8x384xf32>
    %123 = vector.extract_strided_slice %122 {offsets = [0, 0], sizes = [8, 128], strides = [1, 1]} : vector<8x384xf32> to vector<8x128xf32>
    %124 = vector.extract_strided_slice %122 {offsets = [0, 128], sizes = [8, 128], strides = [1, 1]} : vector<8x384xf32> to vector<8x128xf32>
    %125 = vector.extract_strided_slice %122 {offsets = [0, 256], sizes = [8, 128], strides = [1, 1]} : vector<8x384xf32> to vector<8x128xf32>
    %126 = vector.extract_strided_slice %116 {offsets = [0, 384], sizes = [8, 128], strides = [1, 1]} : vector<8x512xf32> to vector<8x128xf32>
    %127 = math.tanh %126 : vector<8x128xf32>
    %128 = arith.mulf %124, %106 : vector<8x128xf32>
    %129 = arith.mulf %123, %127 : vector<8x128xf32>
    %130 = arith.addf %128, %129 : vector<8x128xf32>
    %131 = math.tanh %130 : vector<8x128xf32>
    %132 = arith.mulf %125, %131 : vector<8x128xf32>
    %133 = arith.addf %109, %132 : vector<8x128xf32>
    %c5_i32 = arith.constant 5 : i32
    %c8_i32_36 = arith.constant 8 : i32
    %134 = arith.muli %c5_i32, %c8_i32_36 : i32
    %135 = tpu.assume_multiple %134, 8 : i32
    %136 = arith.index_cast %135 : i32 to index
    %c0_37 = arith.constant 0 : index
    %137 = vector.load %arg6[%136, %c0_37] : memref<64x512xf32, #tpu.memory_space<vmem>>, vector<8x512xf32>
    %138 = arith.truncf %132 : vector<8x128xf32> to vector<8x128xbf16>
    %cst_38 = arith.constant dense<0.000000e+00> : vector<8x512xf32>
    %139 = tpu.matmul %138, %10, %cst_38 {dimension_numbers = #tpu.dot_dimension_numbers<[1], [0], [0], [1], [0, 0, 1, 1], [], []>} : vector<8x128xbf16>, vector<128x512xbf16>, vector<8x512xf32> -> vector<8x512xf32>
    %140 = arith.addf %137, %139 : vector<8x512xf32>
    %141 = vector.extract_strided_slice %140 {offsets = [0, 0], sizes = [8, 384], strides = [1, 1]} : vector<8x512xf32> to vector<8x384xf32>
    %142 = arith.negf %141 : vector<8x384xf32>
    %143 = math.exp %142 : vector<8x384xf32>
    %cst_39 = arith.constant 1.000000e+00 : f32
    %144 = vector.broadcast %cst_39 : f32 to vector<8x384xf32>
    %145 = arith.addf %144, %143 : vector<8x384xf32>
    %146 = arith.divf %144, %145 : vector<8x384xf32>
    %147 = vector.extract_strided_slice %146 {offsets = [0, 0], sizes = [8, 128], strides = [1, 1]} : vector<8x384xf32> to vector<8x128xf32>
    %148 = vector.extract_strided_slice %146 {offsets = [0, 128], sizes = [8, 128], strides = [1, 1]} : vector<8x384xf32> to vector<8x128xf32>
    %149 = vector.extract_strided_slice %146 {offsets = [0, 256], sizes = [8, 128], strides = [1, 1]} : vector<8x384xf32> to vector<8x128xf32>
    %150 = vector.extract_strided_slice %140 {offsets = [0, 384], sizes = [8, 128], strides = [1, 1]} : vector<8x512xf32> to vector<8x128xf32>
    %151 = math.tanh %150 : vector<8x128xf32>
    %152 = arith.mulf %148, %130 : vector<8x128xf32>
    %153 = arith.mulf %147, %151 : vector<8x128xf32>
    %154 = arith.addf %152, %153 : vector<8x128xf32>
    %155 = math.tanh %154 : vector<8x128xf32>
    %156 = arith.mulf %149, %155 : vector<8x128xf32>
    %157 = arith.addf %133, %156 : vector<8x128xf32>
    %c6_i32 = arith.constant 6 : i32
    %c8_i32_40 = arith.constant 8 : i32
    %158 = arith.muli %c6_i32, %c8_i32_40 : i32
    %159 = tpu.assume_multiple %158, 8 : i32
    %160 = arith.index_cast %159 : i32 to index
    %c0_41 = arith.constant 0 : index
    %161 = vector.load %arg6[%160, %c0_41] : memref<64x512xf32, #tpu.memory_space<vmem>>, vector<8x512xf32>
    %162 = arith.truncf %156 : vector<8x128xf32> to vector<8x128xbf16>
    %cst_42 = arith.constant dense<0.000000e+00> : vector<8x512xf32>
    %163 = tpu.matmul %162, %10, %cst_42 {dimension_numbers = #tpu.dot_dimension_numbers<[1], [0], [0], [1], [0, 0, 1, 1], [], []>} : vector<8x128xbf16>, vector<128x512xbf16>, vector<8x512xf32> -> vector<8x512xf32>
    %164 = arith.addf %161, %163 : vector<8x512xf32>
    %165 = vector.extract_strided_slice %164 {offsets = [0, 0], sizes = [8, 384], strides = [1, 1]} : vector<8x512xf32> to vector<8x384xf32>
    %166 = arith.negf %165 : vector<8x384xf32>
    %167 = math.exp %166 : vector<8x384xf32>
    %cst_43 = arith.constant 1.000000e+00 : f32
    %168 = vector.broadcast %cst_43 : f32 to vector<8x384xf32>
    %169 = arith.addf %168, %167 : vector<8x384xf32>
    %170 = arith.divf %168, %169 : vector<8x384xf32>
    %171 = vector.extract_strided_slice %170 {offsets = [0, 0], sizes = [8, 128], strides = [1, 1]} : vector<8x384xf32> to vector<8x128xf32>
    %172 = vector.extract_strided_slice %170 {offsets = [0, 128], sizes = [8, 128], strides = [1, 1]} : vector<8x384xf32> to vector<8x128xf32>
    %173 = vector.extract_strided_slice %170 {offsets = [0, 256], sizes = [8, 128], strides = [1, 1]} : vector<8x384xf32> to vector<8x128xf32>
    %174 = vector.extract_strided_slice %164 {offsets = [0, 384], sizes = [8, 128], strides = [1, 1]} : vector<8x512xf32> to vector<8x128xf32>
    %175 = math.tanh %174 : vector<8x128xf32>
    %176 = arith.mulf %172, %154 : vector<8x128xf32>
    %177 = arith.mulf %171, %175 : vector<8x128xf32>
    %178 = arith.addf %176, %177 : vector<8x128xf32>
    %179 = math.tanh %178 : vector<8x128xf32>
    %180 = arith.mulf %173, %179 : vector<8x128xf32>
    %181 = arith.addf %157, %180 : vector<8x128xf32>
    %c7_i32 = arith.constant 7 : i32
    %c8_i32_44 = arith.constant 8 : i32
    %182 = arith.muli %c7_i32, %c8_i32_44 : i32
    %183 = tpu.assume_multiple %182, 8 : i32
    %184 = arith.index_cast %183 : i32 to index
    %c0_45 = arith.constant 0 : index
    %185 = vector.load %arg6[%184, %c0_45] : memref<64x512xf32, #tpu.memory_space<vmem>>, vector<8x512xf32>
    %186 = arith.truncf %180 : vector<8x128xf32> to vector<8x128xbf16>
    %cst_46 = arith.constant dense<0.000000e+00> : vector<8x512xf32>
    %187 = tpu.matmul %186, %10, %cst_46 {dimension_numbers = #tpu.dot_dimension_numbers<[1], [0], [0], [1], [0, 0, 1, 1], [], []>} : vector<8x128xbf16>, vector<128x512xbf16>, vector<8x512xf32> -> vector<8x512xf32>
    %188 = arith.addf %185, %187 : vector<8x512xf32>
    %189 = vector.extract_strided_slice %188 {offsets = [0, 0], sizes = [8, 384], strides = [1, 1]} : vector<8x512xf32> to vector<8x384xf32>
    %190 = arith.negf %189 : vector<8x384xf32>
    %191 = math.exp %190 : vector<8x384xf32>
    %cst_47 = arith.constant 1.000000e+00 : f32
    %192 = vector.broadcast %cst_47 : f32 to vector<8x384xf32>
    %193 = arith.addf %192, %191 : vector<8x384xf32>
    %194 = arith.divf %192, %193 : vector<8x384xf32>
    %195 = vector.extract_strided_slice %194 {offsets = [0, 0], sizes = [8, 128], strides = [1, 1]} : vector<8x384xf32> to vector<8x128xf32>
    %196 = vector.extract_strided_slice %194 {offsets = [0, 128], sizes = [8, 128], strides = [1, 1]} : vector<8x384xf32> to vector<8x128xf32>
    %197 = vector.extract_strided_slice %194 {offsets = [0, 256], sizes = [8, 128], strides = [1, 1]} : vector<8x384xf32> to vector<8x128xf32>
    %198 = vector.extract_strided_slice %188 {offsets = [0, 384], sizes = [8, 128], strides = [1, 1]} : vector<8x512xf32> to vector<8x128xf32>
    %199 = math.tanh %198 : vector<8x128xf32>
    %200 = arith.mulf %196, %178 : vector<8x128xf32>
    %201 = arith.mulf %195, %199 : vector<8x128xf32>
    %202 = arith.addf %200, %201 : vector<8x128xf32>
    %203 = math.tanh %202 : vector<8x128xf32>
    %204 = arith.mulf %197, %203 : vector<8x128xf32>
    %205 = arith.addf %181, %204 : vector<8x128xf32>
    %c8_i32_48 = arith.constant 8 : i32
    %c0_49 = arith.constant 0 : index
    %c0_50 = arith.constant 0 : index
    %206 = vector.load %arg7[%c0_49, %c0_50] : memref<8x128xf32, #tpu.memory_space<vmem>>, vector<8x128xf32>
    tpu.vector_store %arg7[%c0_49, %c0_50], %204 {strides = array<i32>} : memref<8x128xf32, #tpu.memory_space<vmem>>, vector<8x128xf32>,
    %c0_51 = arith.constant 0 : index
    %c0_52 = arith.constant 0 : index
    %207 = vector.load %arg8[%c0_51, %c0_52] : memref<8x128xf32, #tpu.memory_space<vmem>>, vector<8x128xf32>
    tpu.vector_store %arg8[%c0_51, %c0_52], %202 {strides = array<i32>} : memref<8x128xf32, #tpu.memory_space<vmem>>, vector<8x128xf32>,
    %c0_53 = arith.constant 0 : index
    %c0_54 = arith.constant 0 : index
    %208 = vector.load %arg9[%c0_53, %c0_54] : memref<8x128xf32, #tpu.memory_space<vmem>>, vector<8x128xf32>
    tpu.vector_store %arg9[%c0_53, %c0_54], %205 {strides = array<i32>} : memref<8x128xf32, #tpu.memory_space<vmem>>, vector<8x128xf32>,
    %c0_i32_55 = arith.constant 0 : i32
    %209 = arith.cmpi eq, %arg0, %c0_i32_55 : i32
    %210 = arith.extui %209 : i1 to i32
    %c0_i32_56 = arith.constant 0 : i32
    %211 = arith.cmpi ne, %210, %c0_i32_56 : i32
    scf.if %211 {
      %c0_57 = arith.constant 0 : index
      %c0_58 = arith.constant 0 : index
      %212 = vector.load %arg9[%c0_57, %c0_58] : memref<8x128xf32, #tpu.memory_space<vmem>>, vector<8x128xf32>
      %cst_59 = arith.constant 1.250000e-01 : f32
      %213 = vector.broadcast %cst_59 : f32 to vector<8x128xf32>
      %214 = arith.mulf %212, %213 : vector<8x128xf32>
      %c0_60 = arith.constant 0 : index
      %c0_61 = arith.constant 0 : index
      %215 = vector.load %arg5[%c0_60, %c0_61] : memref<8x128xf32, #tpu.memory_space<vmem>>, vector<8x128xf32>
      tpu.vector_store %arg5[%c0_60, %c0_61], %214 {strides = array<i32>} : memref<8x128xf32, #tpu.memory_space<vmem>>, vector<8x128xf32>,
    } else {
    }
    return
  }
  func.func @transform_0(%arg0: i32) -> (i32, i32) {
    %c0_i32 = arith.constant 0 : i32
    %c0_i32_0 = arith.constant 0 : i32
    return %arg0, %c0_i32 : i32, i32
  }
  func.func @transform_1(%arg0: i32) -> (i32, i32) {
    %c0_i32 = arith.constant 0 : i32
    %c0_i32_0 = arith.constant 0 : i32
    %c0_i32_1 = arith.constant 0 : i32
    return %c0_i32, %c0_i32_0 : i32, i32
  }
  func.func @transform_2(%arg0: i32) -> (i32, i32) {
    %c0_i32 = arith.constant 0 : i32
    %c0_i32_0 = arith.constant 0 : i32
    %c0_i32_1 = arith.constant 0 : i32
    return %c0_i32, %c0_i32_0 : i32, i32
  }
  func.func @transform_3(%arg0: i32) -> (i32, i32) {
    %c0_i32 = arith.constant 0 : i32
    %c0_i32_0 = arith.constant 0 : i32
    %c0_i32_1 = arith.constant 0 : i32
    return %c0_i32, %c0_i32_0 : i32, i32
  }
  func.func @transform_4(%arg0: i32) -> (i32, i32) {
    %c0_i32 = arith.constant 0 : i32
    %c0_i32_0 = arith.constant 0 : i32
    %c0_i32_1 = arith.constant 0 : i32
    return %c0_i32, %c0_i32_0 : i32, i32
  }
}

</mosaic_0001>

<llo_original>
// kernel: tpu_custom_call.1
$region0: #{tpu_custom_call.1}
  #allocation0 [shape = 'u32[]', space=smem, size = 0x4, offset = 0x4, fixed_abs, tag = 'smem constant byte address 0x4 - core index']
  #allocation1 [shape = 'u32[144,128]{1,0:T(1,128)}', space=vmem, size = 0x12000, scoped, tag = 'internal scratch']
  #allocation2 [shape = 'f32[64,512]{1,0:T(8,128)}', space=vmem, size = 0x20000, scoped, tag = 'scratch operand']
  #allocation3 [shape = 'f32[8,128]{1,0:T(8,128)}', space=vmem, size = 0x1000, scoped, tag = 'scratch operand']
  #allocation4 [shape = 'f32[8,128]{1,0:T(8,128)}', space=vmem, size = 0x1000, scoped, tag = 'scratch operand']
  #allocation5 [shape = 'f32[8,128]{1,0:T(8,128)}', space=vmem, size = 0x1000, scoped, tag = 'scratch operand']
  %s0 = inlined_call_operand.vmem [shape: bf16[64,4], index: 0, kind: input, shape index: {}]
  %s1 = inlined_call_operand.vmem [shape: bf16[4,512], index: 1, kind: input, shape index: {}]
  %s2 = inlined_call_operand.hbm [shape: bf16[128,512], index: 2, kind: input, shape index: {}]
  %s3 = inlined_call_operand.vmem [shape: f32[1,512], index: 3, kind: input, shape index: {}]
  %s4 = inlined_call_operand.hbm [shape: f32[8,128], index: 4, kind: output, shape index: {}]
  %s5 = sld [smem:[#allocation0]]
  $region38: #{tpu_custom_call.1} parent=0
    _
  %s7 = ssub.s32 1, %s5
  %s8 = scalar_select 0, %s7, %s5
  $region1: #{tpu_custom_call.1} parent=0
    #allocation6 [shape = 'u8[131072]{0}', space=vmem, size = 0x20000, scoped, tag = 'input window, operand 2, single buffered']
    #allocation7 [shape = 's32[1]{0}', space=sflag, size = 0x4, scoped, tag = 'scoped memory for tpu_custom_call.1']
    #allocation8 [shape = 's32[1]{0}', space=sflag, size = 0x4, scoped, tag = 'scoped memory for tpu_custom_call.1']
    #allocation9 [shape = 'u8[4096]{0}', space=vmem, size = 0x1000, scoped, tag = 'output window, operand 0, single buffered']
    %9 = vsyncpa [#allocation7], 0
    %10 = vsyncpa [#allocation8], 0
    // Predicated region
    $region2: #{tpu_custom_call.1} parent=1 // pred_check
      _
    $region3: #{tpu_custom_call.1} parent=1 // pred_check_branch
      %12 = sbr.rel (0) target = $region5
    $region4: #{tpu_custom_call.1} parent=1 // pred_region
      _
    $region5: #{tpu_custom_call.1} parent=1 // pred_fallthru
      _
    // Predicated region
    $region6: #{tpu_custom_call.1} parent=1 // pred_check
      _
    $region7: #{tpu_custom_call.1} parent=1 // pred_check_branch
      %14 = sbr.rel (0) target = $region9
    $region8: #{tpu_custom_call.1} parent=1 // pred_region
      _
    $region9: #{tpu_custom_call.1} parent=1 // pred_fallthru
      _
    // Predicated region
    $region10: #{tpu_custom_call.1} parent=1 // pred_check
      _
    $region11: #{tpu_custom_call.1} parent=1 // pred_check_branch
      %16 = sbr.rel (0) target = $region13
    $region12: #{tpu_custom_call.1} parent=1 // pred_region
      %s18 = ssub.s32 4096, 4096
      %19 = vsyncadd [#allocation7], %s18
      %s20 = sshll.u32 [#allocation6], 4
      %s21 = int_to_ptr.vmem [resolvable:$true] %s20
      %26 = dma.hbm_to_vmem [thread:$0]  %s2, 4096, %s21, [#allocation7], 256, 256, 16
    $region13: #{tpu_custom_call.1} parent=1 // pred_fallthru
      _
    // Predicated region
    $region14: #{tpu_custom_call.1} parent=1 // pred_check
      _
    $region15: #{tpu_custom_call.1} parent=1 // pred_check_branch
      %28 = sbr.rel (0) target = $region17
    $region16: #{tpu_custom_call.1} parent=1 // pred_region
      _
    $region17: #{tpu_custom_call.1} parent=1 // pred_fallthru
      _
    // Predicated region
    $region18: #{tpu_custom_call.1} parent=1 // pred_check
      _
    $region19: #{tpu_custom_call.1} parent=1 // pred_check_branch
      %30 = sbr.rel (0) target = $region21
    $region20: #{tpu_custom_call.1} parent=1 // pred_region
      %31 = dma.done [#allocation7], 4096
    $region21: #{tpu_custom_call.1} parent=1 // pred_fallthru
      _
    %p33 = scmp.eq.s32.totalorder 0, 0
    // Predicated region
    $region22: #{tpu_custom_call.1} parent=1 // pred_check
      %p34 = pneg %p33
    $region23: #{tpu_custom_call.1} parent=1 // pred_check_branch
      %36 = sbr.rel (%p34) target = $region25
    $region24: #{tpu_custom_call.1} parent=1 // pred_region
      %37 = vst [vmem:[#allocation3] sm:$0xff] 0.0
      %38 = vst [vmem:[#allocation4] sm:$0xff] 0.0
      %39 = vst [vmem:[#allocation5] sm:$0xff] 0.0
    $region25: #{tpu_custom_call.1} parent=1 // pred_fallthru
      _
    %v40 = vld [vmem:[%s0] sm:$0xf]
    %v41 = vld [vmem:[%s0 + $0x4] sm:$0xf]
    %v42 = vld [vmem:[%s0 + $0x8] sm:$0xf]
    %v43 = vld [vmem:[%s0 + $0xc] sm:$0xf]
    %v44 = vld [vmem:[%s0 + $0x10] sm:$0xf]
    %v45 = vld [vmem:[%s0 + $0x14] sm:$0xf]
    %v46 = vld [vmem:[%s0 + $0x18] sm:$0xf]
    %v47 = vld [vmem:[%s0 + $0x1c] sm:$0xf]
    %v48 = vld [vmem:[%s1] sm:$0xff]
    %v49 = vld [vmem:[%s3] sm:$0xf]
    %v51 = vlaneseq
    %v52 = vshrl.u32 %v51, 7
    %v53 = vsub.s32 0, %v52
    %v54 = vrot.slane %v49, %v53
    %v55 = vlaneseq
    %v56 = vshrl.u32 %v55, 7
    %v57 = vsub.s32 1, %v56
    %v58 = vrot.slane %v49, %v57
    %v59 = vlaneseq
    %v60 = vshrl.u32 %v59, 7
    %v61 = vsub.s32 2, %v60
    %v62 = vrot.slane %v49, %v61
    %v63 = vlaneseq
    %v64 = vshrl.u32 %v63, 7
    %v65 = vsub.s32 3, %v64
    %v66 = vrot.slane %v49, %v65
    %v79 = vunpack.c.l.b16 %v40
    %v80 = vunpack.c.l.b16 %v41
    %v81 = vunpack.c.l.b16 %v42
    %v82 = vunpack.c.l.b16 %v43
    %v83 = vunpack.c.l.b16 %v44
    %v84 = vunpack.c.l.b16 %v45
    %v85 = vunpack.c.l.b16 %v46
    %v86 = vunpack.c.l.b16 %v47
    %v87 = vpack.c.b16 %v80, %v79
    %v88 = vpack.c.b16 %v82, %v81
    %v89 = vpack.c.b16 %v84, %v83
    %v90 = vpack.c.b16 %v86, %v85
    %v92 = vcombine.high %v48, %v48
    %v94 = vunpack.c.l.s4 1983009808
    %v95 = vunpack.c.0.s8 %v94
    %v96 = vlaneseq
    %v97 = vshrl.u32 %v96, 7
    %v98 = vsub.s32 %v95, %v97
    %v99 = vrot.slane %v48, %v98
    %v101 = vunpack.c.l.s4 1983009808
    %v102 = vunpack.c.0.s8 %v101
    %v103 = vlaneseq
    %v104 = vshrl.u32 %v103, 7
    %v105 = vsub.s32 %v102, %v104
    %v106 = vrot.slane %v92, %v105
    %v107 = vcombine.high %v99, %v99
    %v108 = vcombine.high %v106, %v106
    %vm109 = vcmask 31744
    %v111 = vsel %vm109, %v87, 0
    %v114 = vsel %vm109, %v88, 0
    %v117 = vsel %vm109, %v89, 0
    %v120 = vsel %vm109, %v90, 0
    %vm122 = vcmask 1041408
    %v124 = vsel %vm122, %v99, 0
    %v127 = vsel %vm122, %v107, 0
    %v130 = vsel %vm122, %v106, 0
    %v133 = vsel %vm122, %v108, 0
    %135 = vmatprep.subr.bf16.mxu0 %v127
    %136 = vmatpush1.bf16.msra.mxu0 %v124
    %137 = vmatprep.subr.bf16.mxu0 0
    %138 = vmatpush1.bf16.msra.mxu0 0
    %139 = vmatprep.subr.bf16.mxu0 0
    %140 = vmatpush1.bf16.msra.mxu0 0
    %141 = vmatprep.subr.bf16.mxu0 0
    %142 = vmatpush1.bf16.msra.mxu0 0
    %143 = vmatprep.subr.bf16.mxu0 0
    %144 = vmatpush1.bf16.msra.mxu0 0
    %145 = vmatprep.subr.bf16.mxu0 0
    %146 = vmatpush1.bf16.msra.mxu0 0
    %147 = vmatprep.subr.bf16.mxu0 0
    %148 = vmatpush1.bf16.msra.mxu0 0
    %149 = vmatprep.subr.bf16.mxu0 0
    %150 = vmatpush1.bf16.msra.mxu0 0
    %151 = vmatprep.subr.bf16.mxu0 0
    %152 = vmatpush1.bf16.msra.mxu0 0
    %153 = vmatprep.subr.bf16.mxu0 0
    %154 = vmatpush1.bf16.msra.mxu0 0
    %155 = vmatprep.subr.bf16.mxu0 0
    %156 = vmatpush1.bf16.msra.mxu0 0
    %157 = vmatprep.subr.bf16.mxu0 0
    %158 = vmatpush1.bf16.msra.mxu0 0
    %159 = vmatprep.subr.bf16.mxu0 0
    %160 = vmatpush1.bf16.msra.mxu0 0
    %161 = vmatprep.subr.bf16.mxu0 0
    %162 = vmatpush1.bf16.msra.mxu0 0
    %163 = vmatprep.subr.bf16.mxu0 0
    %164 = vmatpush1.bf16.msra.mxu0 0
    %165 = vmatprep.subr.bf16.mxu0 0
    %166 = vmatpush1.bf16.msra.mxu0 0
    %167 = vmatprep.mubr.bf16.mxu0 0
    %168 = vmatmul.mubr.bf16.gmra.mrb[0].mxu0 %v111
    %v169 = vpop.f32.mrb[0].mxu0
    %v170 = vadd.f32 %v54, %v169
    %v171 = vpop.f32.mrb[0].mxu0
    %v172 = vadd.f32 %v58, %v171
    %v173 = vpop.f32.mrb[0].mxu0
    %v174 = vadd.f32 %v54, %v173
    %v175 = vpop.f32.mrb[0].mxu0
    %v176 = vadd.f32 %v58, %v175
    %177 = vmatprep.mubr.bf16.mxu0 0
    %178 = vmatmul.mubr.bf16.gmra.mrb[0].mxu0 %v114
    %v179 = vpop.f32.mrb[0].mxu0
    %v180 = vadd.f32 %v54, %v179
    %v181 = vpop.f32.mrb[0].mxu0
    %v182 = vadd.f32 %v58, %v181
    %v183 = vpop.f32.mrb[0].mxu0
    %v184 = vadd.f32 %v54, %v183
    %v185 = vpop.f32.mrb[0].mxu0
    %v186 = vadd.f32 %v58, %v185
    %187 = vmatprep.mubr.bf16.mxu0 0
    %188 = vmatmul.mubr.bf16.gmra.mrb[0].mxu0 %v117
    %v189 = vpop.f32.mrb[0].mxu0
    %v190 = vadd.f32 %v54, %v189
    %v191 = vpop.f32.mrb[0].mxu0
    %v192 = vadd.f32 %v58, %v191
    %v193 = vpop.f32.mrb[0].mxu0
    %v194 = vadd.f32 %v54, %v193
    %v195 = vpop.f32.mrb[0].mxu0
    %v196 = vadd.f32 %v58, %v195
    %197 = vmatprep.mubr.bf16.mxu0 0
    %198 = vmatmul.mubr.bf16.gmra.mrb[0].mxu0 %v120
    %v199 = vpop.f32.mrb[0].mxu0
    %v200 = vadd.f32 %v54, %v199
    %v201 = vpop.f32.mrb[0].mxu0
    %v202 = vadd.f32 %v58, %v201
    %v203 = vpop.f32.mrb[0].mxu0
    %v204 = vadd.f32 %v54, %v203
    %v205 = vpop.f32.mrb[0].mxu0
    %v206 = vadd.f32 %v58, %v205
    %207 = vdwg.mxu0
    %208 = vmatprep.subr.bf16.mxu0 %v133
    %209 = vmatpush1.bf16.msra.mxu0 %v130
    %210 = vmatprep.subr.bf16.mxu0 0
    %211 = vmatpush1.bf16.msra.mxu0 0
    %212 = vmatprep.subr.bf16.mxu0 0
    %213 = vmatpush1.bf16.msra.mxu0 0
    %214 = vmatprep.subr.bf16.mxu0 0
    %215 = vmatpush1.bf16.msra.mxu0 0
    %216 = vmatprep.subr.bf16.mxu0 0
    %217 = vmatpush1.bf16.msra.mxu0 0
    %218 = vmatprep.subr.bf16.mxu0 0
    %219 = vmatpush1.bf16.msra.mxu0 0
    %220 = vmatprep.subr.bf16.mxu0 0
    %221 = vmatpush1.bf16.msra.mxu0 0
    %222 = vmatprep.subr.bf16.mxu0 0
    %223 = vmatpush1.bf16.msra.mxu0 0
    %224 = vmatprep.subr.bf16.mxu0 0
    %225 = vmatpush1.bf16.msra.mxu0 0
    %226 = vmatprep.subr.bf16.mxu0 0
    %227 = vmatpush1.bf16.msra.mxu0 0
    %228 = vmatprep.subr.bf16.mxu0 0
    %229 = vmatpush1.bf16.msra.mxu0 0
    %230 = vmatprep.subr.bf16.mxu0 0
    %231 = vmatpush1.bf16.msra.mxu0 0
    %232 = vmatprep.subr.bf16.mxu0 0
    %233 = vmatpush1.bf16.msra.mxu0 0
    %234 = vmatprep.subr.bf16.mxu0 0
    %235 = vmatpush1.bf16.msra.mxu0 0
    %236 = vmatprep.subr.bf16.mxu0 0
    %237 = vmatpush1.bf16.msra.mxu0 0
    %238 = vmatprep.subr.bf16.mxu0 0
    %239 = vmatpush1.bf16.msra.mxu0 0
    %240 = vmatprep.mubr.bf16.mxu0 0
    %241 = vmatmul.mubr.bf16.gmra.mrb[0].mxu0 %v111
    %v242 = vpop.f32.mrb[0].mxu0
    %v243 = vadd.f32 %v62, %v242
    %v244 = vpop.f32.mrb[0].mxu0
    %v245 = vadd.f32 %v66, %v244
    %v246 = vpop.f32.mrb[0].mxu0
    %v247 = vadd.f32 %v62, %v246
    %v248 = vpop.f32.mrb[0].mxu0
    %v249 = vadd.f32 %v66, %v248
    %250 = vmatprep.mubr.bf16.mxu0 0
    %251 = vmatmul.mubr.bf16.gmra.mrb[0].mxu0 %v114
    %v252 = vpop.f32.mrb[0].mxu0
    %v253 = vadd.f32 %v62, %v252
    %v254 = vpop.f32.mrb[0].mxu0
    %v255 = vadd.f32 %v66, %v254
    %v256 = vpop.f32.mrb[0].mxu0
    %v257 = vadd.f32 %v62, %v256
    %v258 = vpop.f32.mrb[0].mxu0
    %v259 = vadd.f32 %v66, %v258
    %260 = vmatprep.mubr.bf16.mxu0 0
    %261 = vmatmul.mubr.bf16.gmra.mrb[0].mxu0 %v117
    %v262 = vpop.f32.mrb[0].mxu0
    %v263 = vadd.f32 %v62, %v262
    %v264 = vpop.f32.mrb[0].mxu0
    %v265 = vadd.f32 %v66, %v264
    %v266 = vpop.f32.mrb[0].mxu0
    %v267 = vadd.f32 %v62, %v266
    %v268 = vpop.f32.mrb[0].mxu0
    %v269 = vadd.f32 %v66, %v268
    %270 = vmatprep.mubr.bf16.mxu0 0
    %271 = vmatmul.mubr.bf16.gmra.mrb[0].mxu0 %v120
    %v272 = vpop.f32.mrb[0].mxu0
    %v273 = vadd.f32 %v62, %v272
    %v274 = vpop.f32.mrb[0].mxu0
    %v275 = vadd.f32 %v66, %v274
    %v276 = vpop.f32.mrb[0].mxu0
    %v277 = vadd.f32 %v62, %v276
    %v278 = vpop.f32.mrb[0].mxu0
    %v279 = vadd.f32 %v66, %v278
    %280 = vdwg.mxu0
    %281 = vst [vmem:[#allocation2] sm:$0xff] %v170
    %282 = vst [vmem:[#allocation2 + $0x8] sm:$0xff] %v172
    %283 = vst [vmem:[#allocation2 + $0x10] sm:$0xff] %v243
    %284 = vst [vmem:[#allocation2 + $0x18] sm:$0xff] %v245
    %285 = vst [vmem:[#allocation2 + $0x20] sm:$0xff] %v174
    %286 = vst [vmem:[#allocation2 + $0x28] sm:$0xff] %v176
    %287 = vst [vmem:[#allocation2 + $0x30] sm:$0xff] %v247
    %288 = vst [vmem:[#allocation2 + $0x38] sm:$0xff] %v249
    %289 = vst [vmem:[#allocation2 + $0x40] sm:$0xff] %v180
    %290 = vst [vmem:[#allocation2 + $0x48] sm:$0xff] %v182
    %291 = vst [vmem:[#allocation2 + $0x50] sm:$0xff] %v253
    %292 = vst [vmem:[#allocation2 + $0x58] sm:$0xff] %v255
    %293 = vst [vmem:[#allocation2 + $0x60] sm:$0xff] %v184
    %294 = vst [vmem:[#allocation2 + $0x68] sm:$0xff] %v186
    %295 = vst [vmem:[#allocation2 + $0x70] sm:$0xff] %v257
    %296 = vst [vmem:[#allocation2 + $0x78] sm:$0xff] %v259
    %297 = vst [vmem:[#allocation2 + $0x80] sm:$0xff] %v190
    %298 = vst [vmem:[#allocation2 + $0x88] sm:$0xff] %v192
    %299 = vst [vmem:[#allocation2 + $0x90] sm:$0xff] %v263
    %300 = vst [vmem:[#allocation2 + $0x98] sm:$0xff] %v265
    %301 = vst [vmem:[#allocation2 + $0xa0] sm:$0xff] %v194
    %302 = vst [vmem:[#allocation2 + $0xa8] sm:$0xff] %v196
    %303 = vst [vmem:[#allocation2 + $0xb0] sm:$0xff] %v267
    %304 = vst [vmem:[#allocation2 + $0xb8] sm:$0xff] %v269
    %305 = vst [vmem:[#allocation2 + $0xc0] sm:$0xff] %v200
    %306 = vst [vmem:[#allocation2 + $0xc8] sm:$0xff] %v202
    %307 = vst [vmem:[#allocation2 + $0xd0] sm:$0xff] %v273
    %308 = vst [vmem:[#allocation2 + $0xd8] sm:$0xff] %v275
    %309 = vst [vmem:[#allocation2 + $0xe0] sm:$0xff] %v204
    %310 = vst [vmem:[#allocation2 + $0xe8] sm:$0xff] %v206
    %311 = vst [vmem:[#allocation2 + $0xf0] sm:$0xff] %v277
    %312 = vst [vmem:[#allocation2 + $0xf8] sm:$0xff] %v279
    %v313 = vld [vmem:[#allocation6] sm:$0xff]
    %v314 = vld [vmem:[#allocation6 + $0x8] sm:$0xff]
    %v315 = vld [vmem:[#allocation6 + $0x10] sm:$0xff]
    %v316 = vld [vmem:[#allocation6 + $0x18] sm:$0xff]
    %v317 = vld [vmem:[#allocation6 + $0x20] sm:$0xff]
    %v318 = vld [vmem:[#allocation6 + $0x28] sm:$0xff]
    %v319 = vld [vmem:[#allocation6 + $0x30] sm:$0xff]
    %v320 = vld [vmem:[#allocation6 + $0x38] sm:$0xff]
    %v321 = vld [vmem:[#allocation6 + $0x40] sm:$0xff]
    %v322 = vld [vmem:[#allocation6 + $0x48] sm:$0xff]
    %v323 = vld [vmem:[#allocation6 + $0x50] sm:$0xff]
    %v324 = vld [vmem:[#allocation6 + $0x58] sm:$0xff]
    %v325 = vld [vmem:[#allocation6 + $0x60] sm:$0xff]
    %v326 = vld [vmem:[#allocation6 + $0x68] sm:$0xff]
    %v327 = vld [vmem:[#allocation6 + $0x70] sm:$0xff]
    %v328 = vld [vmem:[#allocation6 + $0x78] sm:$0xff]
    %v329 = vld [vmem:[#allocation6 + $0x80] sm:$0xff]
    %v330 = vld [vmem:[#allocation6 + $0x88] sm:$0xff]
    %v331 = vld [vmem:[#allocation6 + $0x90] sm:$0xff]
    %v332 = vld [vmem:[#allocation6 + $0x98] sm:$0xff]
    %v333 = vld [vmem:[#allocation6 + $0xa0] sm:$0xff]
    %v334 = vld [vmem:[#allocation6 + $0xa8] sm:$0xff]
    %v335 = vld [vmem:[#allocation6 + $0xb0] sm:$0xff]
    %v336 = vld [vmem:[#allocation6 + $0xb8] sm:$0xff]
    %v337 = vld [vmem:[#allocation6 + $0xc0] sm:$0xff]
    %v338 = vld [vmem:[#allocation6 + $0xc8] sm:$0xff]
    %v339 = vld [vmem:[#allocation6 + $0xd0] sm:$0xff]
    %v340 = vld [vmem:[#allocation6 + $0xd8] sm:$0xff]
    %v341 = vld [vmem:[#allocation6 + $0xe0] sm:$0xff]
    %v342 = vld [vmem:[#allocation6 + $0xe8] sm:$0xff]
    %v343 = vld [vmem:[#allocation6 + $0xf0] sm:$0xff]
    %v344 = vld [vmem:[#allocation6 + $0xf8] sm:$0xff]
    %v345 = vld [vmem:[#allocation3] sm:$0xff]
    %v346 = vld [vmem:[#allocation4] sm:$0xff]
    %v347 = vld [vmem:[#allocation5] sm:$0xff]
    %s348 = smul.u32 0, 4
    %s349 = smul.addr %s348, 8
    %s350 = scalar_lea.vmem [#allocation2], %s349
    %v351 = vld [vmem:[%s350] sm:$0xff]
    %v352 = vld [vmem:[%s350 + $0x8] sm:$0xff]
    %v353 = vld [vmem:[%s350 + $0x10] sm:$0xff]
    %v354 = vld [vmem:[%s350 + $0x18] sm:$0xff]
    %v355 = vpack.c.bf16 %v345, %v345
    %v388 = vunpack.c.l.b16 %v313
    %v389 = vunpack.c.h.b16 %v313
    %v390 = vunpack.c.l.b16 %v314
    %v391 = vunpack.c.h.b16 %v314
    %v392 = vunpack.c.l.b16 %v315
    %v393 = vunpack.c.h.b16 %v315
    %v394 = vunpack.c.l.b16 %v316
    %v395 = vunpack.c.h.b16 %v316
    %v396 = vunpack.c.l.b16 %v317
    %v397 = vunpack.c.h.b16 %v317
    %v398 = vunpack.c.l.b16 %v318
    %v399 = vunpack.c.h.b16 %v318
    %v400 = vunpack.c.l.b16 %v319
    %v401 = vunpack.c.h.b16 %v319
    %v402 = vunpack.c.l.b16 %v320
    %v403 = vunpack.c.h.b16 %v320
    %v404 = vunpack.c.l.b16 %v321
    %v405 = vunpack.c.h.b16 %v321
    %v406 = vunpack.c.l.b16 %v322
    %v407 = vunpack.c.h.b16 %v322
    %v408 = vunpack.c.l.b16 %v323
    %v409 = vunpack.c.h.b16 %v323
    %v410 = vunpack.c.l.b16 %v324
    %v411 = vunpack.c.h.b16 %v324
    %v412 = vunpack.c.l.b16 %v325
    %v413 = vunpack.c.h.b16 %v325
    %v414 = vunpack.c.l.b16 %v326
    %v415 = vunpack.c.h.b16 %v326
    %v416 = vunpack.c.l.b16 %v327
    %v417 = vunpack.c.h.b16 %v327
    %v418 = vunpack.c.l.b16 %v328
    %v419 = vunpack.c.h.b16 %v328
    %v420 = vunpack.c.l.b16 %v329
    %v421 = vunpack.c.h.b16 %v329
    %v422 = vunpack.c.l.b16 %v330
    %v423 = vunpack.c.h.b16 %v330
    %v424 = vunpack.c.l.b16 %v331
    %v425 = vunpack.c.h.b16 %v331
    %v426 = vunpack.c.l.b16 %v332
    %v427 = vunpack.c.h.b16 %v332
    %v428 = vunpack.c.l.b16 %v333
    %v429 = vunpack.c.h.b16 %v333
    %v430 = vunpack.c.l.b16 %v334
    %v431 = vunpack.c.h.b16 %v334
    %v432 = vunpack.c.l.b16 %v335
    %v433 = vunpack.c.h.b16 %v335
    %v434 = vunpack.c.l.b16 %v336
    %v435 = vunpack.c.h.b16 %v336
    %v436 = vunpack.c.l.b16 %v337
    %v437 = vunpack.c.h.b16 %v337
    %v438 = vunpack.c.l.b16 %v338
    %v439 = vunpack.c.h.b16 %v338
    %v440 = vunpack.c.l.b16 %v339
    %v441 = vunpack.c.h.b16 %v339
    %v442 = vunpack.c.l.b16 %v340
    %v443 = vunpack.c.h.b16 %v340
    %v444 = vunpack.c.l.b16 %v341
    %v445 = vunpack.c.h.b16 %v341
    %v446 = vunpack.c.l.b16 %v342
    %v447 = vunpack.c.h.b16 %v342
    %v448 = vunpack.c.l.b16 %v343
    %v449 = vunpack.c.h.b16 %v343
    %v450 = vunpack.c.l.b16 %v344
    %v451 = vunpack.c.h.b16 %v344
    %v452 = vpack.c.b16 %v392, %v388
    %v453 = vpack.c.b16 %v393, %v389
    %v454 = vpack.c.b16 %v394, %v390
    %v455 = vpack.c.b16 %v395, %v391
    %v456 = vpack.c.b16 %v400, %v396
    %v457 = vpack.c.b16 %v401, %v397
    %v458 = vpack.c.b16 %v402, %v398
    %v459 = vpack.c.b16 %v403, %v399
    %v460 = vpack.c.b16 %v408, %v404
    %v461 = vpack.c.b16 %v409, %v405
    %v462 = vpack.c.b16 %v410, %v406
    %v463 = vpack.c.b16 %v411, %v407
    %v464 = vpack.c.b16 %v416, %v412
    %v465 = vpack.c.b16 %v417, %v413
    %v466 = vpack.c.b16 %v418, %v414
    %v467 = vpack.c.b16 %v419, %v415
    %v468 = vpack.c.b16 %v424, %v420
    %v469 = vpack.c.b16 %v425, %v421
    %v470 = vpack.c.b16 %v426, %v422
    %v471 = vpack.c.b16 %v427, %v423
    %v472 = vpack.c.b16 %v432, %v428
    %v473 = vpack.c.b16 %v433, %v429
    %v474 = vpack.c.b16 %v434, %v430
    %v475 = vpack.c.b16 %v435, %v431
    %v476 = vpack.c.b16 %v440, %v436
    %v477 = vpack.c.b16 %v441, %v437
    %v478 = vpack.c.b16 %v442, %v438
    %v479 = vpack.c.b16 %v443, %v439
    %v480 = vpack.c.b16 %v448, %v444
    %v481 = vpack.c.b16 %v449, %v445
    %v482 = vpack.c.b16 %v450, %v446
    %v483 = vpack.c.b16 %v451, %v447
    %516 = vmatprep.subr.bf16.mxu0 %v453
    %517 = vmatpush1.bf16.msra.mxu0 %v452
    %518 = vmatprep.subr.bf16.mxu0 %v457
    %519 = vmatpush1.bf16.msra.mxu0 %v456
    %520 = vmatprep.subr.bf16.mxu0 %v461
    %521 = vmatpush1.bf16.msra.mxu0 %v460
    %522 = vmatprep.subr.bf16.mxu0 %v465
    %523 = vmatpush1.bf16.msra.mxu0 %v464
    %524 = vmatprep.subr.bf16.mxu0 %v469
    %525 = vmatpush1.bf16.msra.mxu0 %v468
    %526 = vmatprep.subr.bf16.mxu0 %v473
    %527 = vmatpush1.bf16.msra.mxu0 %v472
    %528 = vmatprep.subr.bf16.mxu0 %v477
    %529 = vmatpush1.bf16.msra.mxu0 %v476
    %530 = vmatprep.subr.bf16.mxu0 %v481
    %531 = vmatpush1.bf16.msra.mxu0 %v480
    %532 = vmatprep.subr.bf16.mxu0 0
    %533 = vmatpush1.bf16.msra.mxu0 0
    %534 = vmatprep.subr.bf16.mxu0 0
    %535 = vmatpush1.bf16.msra.mxu0 0
    %536 = vmatprep.subr.bf16.mxu0 0
    %537 = vmatpush1.bf16.msra.mxu0 0
    %538 = vmatprep.subr.bf16.mxu0 0
    %539 = vmatpush1.bf16.msra.mxu0 0
    %540 = vmatprep.subr.bf16.mxu0 0
    %541 = vmatpush1.bf16.msra.mxu0 0
    %542 = vmatprep.subr.bf16.mxu0 0
    %543 = vmatpush1.bf16.msra.mxu0 0
    %544 = vmatprep.subr.bf16.mxu0 0
    %545 = vmatpush1.bf16.msra.mxu0 0
    %546 = vmatprep.subr.bf16.mxu0 0
    %547 = vmatpush1.bf16.msra.mxu0 0
    %548 = vmatprep.mubr.bf16.mxu0 0
    %549 = vmatmul.mubr.bf16.gmra.mrb[0].mxu0 %v355
    %v550 = vpop.f32.mrb[0].mxu0
    %v551 = vadd.f32 0.0, %v550
    %v552 = vpop.f32.mrb[0].mxu0
    %v553 = vadd.f32 0.0, %v552
    %v554 = vpop.f32.mrb[0].mxu0
    %v555 = vpop.f32.mrb[0].mxu0
    %556 = vdwg.mxu0
    %557 = vmatprep.subr.bf16.mxu0 %v455
    %558 = vmatpush1.bf16.msra.mxu0 %v454
    %559 = vmatprep.subr.bf16.mxu0 %v459
    %560 = vmatpush1.bf16.msra.mxu0 %v458
    %561 = vmatprep.subr.bf16.mxu0 %v463
    %562 = vmatpush1.bf16.msra.mxu0 %v462
    %563 = vmatprep.subr.bf16.mxu0 %v467
    %564 = vmatpush1.bf16.msra.mxu0 %v466
    %565 = vmatprep.subr.bf16.mxu0 %v471
    %566 = vmatpush1.bf16.msra.mxu0 %v470
    %567 = vmatprep.subr.bf16.mxu0 %v475
    %568 = vmatpush1.bf16.msra.mxu0 %v474
    %569 = vmatprep.subr.bf16.mxu0 %v479
    %570 = vmatpush1.bf16.msra.mxu0 %v478
    %571 = vmatprep.subr.bf16.mxu0 %v483
    %572 = vmatpush1.bf16.msra.mxu0 %v482
    %573 = vmatprep.subr.bf16.mxu0 0
    %574 = vmatpush1.bf16.msra.mxu0 0
    %575 = vmatprep.subr.bf16.mxu0 0
    %576 = vmatpush1.bf16.msra.mxu0 0
    %577 = vmatprep.subr.bf16.mxu0 0
    %578 = vmatpush1.bf16.msra.mxu0 0
    %579 = vmatprep.subr.bf16.mxu0 0
    %580 = vmatpush1.bf16.msra.mxu0 0
    %581 = vmatprep.subr.bf16.mxu0 0
    %582 = vmatpush1.bf16.msra.mxu0 0
    %583 = vmatprep.subr.bf16.mxu0 0
    %584 = vmatpush1.bf16.msra.mxu0 0
    %585 = vmatprep.subr.bf16.mxu0 0
    %586 = vmatpush1.bf16.msra.mxu0 0
    %587 = vmatprep.subr.bf16.mxu0 0
    %588 = vmatpush1.bf16.msra.mxu0 0
    %589 = vmatprep.mubr.bf16.mxu0 0
    %590 = vmatmul.mubr.bf16.gmra.mrb[0].mxu0 %v355
    %v591 = vpop.f32.mrb[0].mxu0
    %v592 = vadd.f32 0.0, %v591
    %v593 = vpop.f32.mrb[0].mxu0
    %v594 = vadd.f32 0.0, %v593
    %v595 = vpop.f32.mrb[0].mxu0
    %v596 = vpop.f32.mrb[0].mxu0
    %597 = vdwg.mxu0
    %v598 = vadd.f32 %v351, %v551
    %v599 = vadd.f32 %v352, %v553
    %v600 = vadd.f32 %v353, %v592
    %v601 = vadd.f32 %v354, %v594
    %v602 = vxor.u32 %v598, 2147483648
    %v603 = vxor.u32 %v599, 2147483648
    %v604 = vxor.u32 %v600, 2147483648
    %v605 = vmul.f32 %v602, 1.442695
    %v606 = vpow.pop %v605
    %v607 = vmul.f32 %v603, 1.442695
    %v608 = vpow.pop %v607
    %v609 = vmul.f32 %v604, 1.442695
    %v610 = vpow.pop %v609
    %v611 = vadd.f32 %v606, 1.0
    %v612 = vadd.f32 %v608, 1.0
    %v613 = vadd.f32 %v610, 1.0
    %v614 = vrcp.pop %v611
    %v615 = vmul.f32 1.0, %v614
    %v616 = vrcp.pop %v612
    %v617 = vmul.f32 1.0, %v616
    %v618 = vrcp.pop %v613
    %v619 = vmul.f32 1.0, %v618
    %v620 = vtanh.pop %v601
    %v621 = vmul.f32 %v617, %v346
    %v622 = vmul.f32 %v615, %v620
    %v623 = vadd.f32 %v621, %v622
    %v624 = vtanh.pop %v623
    %v625 = vmul.f32 %v619, %v624
    %v626 = vadd.f32 %v347, %v625
    %s627 = smul.u32 1, 4
    %s628 = smul.addr %s627, 8
    %s629 = scalar_lea.vmem [#allocation2], %s628
    %v630 = vld [vmem:[%s629] sm:$0xff]
    %v631 = vld [vmem:[%s629 + $0x8] sm:$0xff]
    %v632 = vld [vmem:[%s629 + $0x10] sm:$0xff]
    %v633 = vld [vmem:[%s629 + $0x18] sm:$0xff]
    %v634 = vpack.c.bf16 %v625, %v625
    %635 = vmatprep.subr.bf16.mxu0 %v453
    %636 = vmatpush1.bf16.msra.mxu0 %v452
    %637 = vmatprep.subr.bf16.mxu0 %v457
    %638 = vmatpush1.bf16.msra.mxu0 %v456
    %639 = vmatprep.subr.bf16.mxu0 %v461
    %640 = vmatpush1.bf16.msra.mxu0 %v460
    %641 = vmatprep.subr.bf16.mxu0 %v465
    %642 = vmatpush1.bf16.msra.mxu0 %v464
    %643 = vmatprep.subr.bf16.mxu0 %v469
    %644 = vmatpush1.bf16.msra.mxu0 %v468
    %645 = vmatprep.subr.bf16.mxu0 %v473
    %646 = vmatpush1.bf16.msra.mxu0 %v472
    %647 = vmatprep.subr.bf16.mxu0 %v477
    %648 = vmatpush1.bf16.msra.mxu0 %v476
    %649 = vmatprep.subr.bf16.mxu0 %v481
    %650 = vmatpush1.bf16.msra.mxu0 %v480
    %651 = vmatprep.subr.bf16.mxu0 0
    %652 = vmatpush1.bf16.msra.mxu0 0
    %653 = vmatprep.subr.bf16.mxu0 0
    %654 = vmatpush1.bf16.msra.mxu0 0
    %655 = vmatprep.subr.bf16.mxu0 0
    %656 = vmatpush1.bf16.msra.mxu0 0
    %657 = vmatprep.subr.bf16.mxu0 0
    %658 = vmatpush1.bf16.msra.mxu0 0
    %659 = vmatprep.subr.bf16.mxu0 0
    %660 = vmatpush1.bf16.msra.mxu0 0
    %661 = vmatprep.subr.bf16.mxu0 0
    %662 = vmatpush1.bf16.msra.mxu0 0
    %663 = vmatprep.subr.bf16.mxu0 0
    %664 = vmatpush1.bf16.msra.mxu0 0
    %665 = vmatprep.subr.bf16.mxu0 0
    %666 = vmatpush1.bf16.msra.mxu0 0
    %667 = vmatprep.mubr.bf16.mxu0 0
    %668 = vmatmul.mubr.bf16.gmra.mrb[0].mxu0 %v634
    %v669 = vpop.f32.mrb[0].mxu0
    %v670 = vadd.f32 0.0, %v669
    %v671 = vpop.f32.mrb[0].mxu0
    %v672 = vadd.f32 0.0, %v671
    %v673 = vpop.f32.mrb[0].mxu0
    %v674 = vpop.f32.mrb[0].mxu0
    %675 = vdwg.mxu0
    %676 = vmatprep.subr.bf16.mxu0 %v455
    %677 = vmatpush1.bf16.msra.mxu0 %v454
    %678 = vmatprep.subr.bf16.mxu0 %v459
    %679 = vmatpush1.bf16.msra.mxu0 %v458
    %680 = vmatprep.subr.bf16.mxu0 %v463
    %681 = vmatpush1.bf16.msra.mxu0 %v462
    %682 = vmatprep.subr.bf16.mxu0 %v467
    %683 = vmatpush1.bf16.msra.mxu0 %v466
    %684 = vmatprep.subr.bf16.mxu0 %v471
    %685 = vmatpush1.bf16.msra.mxu0 %v470
    %686 = vmatprep.subr.bf16.mxu0 %v475
    %687 = vmatpush1.bf16.msra.mxu0 %v474
    %688 = vmatprep.subr.bf16.mxu0 %v479
    %689 = vmatpush1.bf16.msra.mxu0 %v478
    %690 = vmatprep.subr.bf16.mxu0 %v483
    %691 = vmatpush1.bf16.msra.mxu0 %v482
    %692 = vmatprep.subr.bf16.mxu0 0
    %693 = vmatpush1.bf16.msra.mxu0 0
    %694 = vmatprep.subr.bf16.mxu0 0
    %695 = vmatpush1.bf16.msra.mxu0 0
    %696 = vmatprep.subr.bf16.mxu0 0
    %697 = vmatpush1.bf16.msra.mxu0 0
    %698 = vmatprep.subr.bf16.mxu0 0
    %699 = vmatpush1.bf16.msra.mxu0 0
    %700 = vmatprep.subr.bf16.mxu0 0
    %701 = vmatpush1.bf16.msra.mxu0 0
    %702 = vmatprep.subr.bf16.mxu0 0
    %703 = vmatpush1.bf16.msra.mxu0 0
    %704 = vmatprep.subr.bf16.mxu0 0
    %705 = vmatpush1.bf16.msra.mxu0 0
    %706 = vmatprep.subr.bf16.mxu0 0
    %707 = vmatpush1.bf16.msra.mxu0 0
    %708 = vmatprep.mubr.bf16.mxu0 0
    %709 = vmatmul.mubr.bf16.gmra.mrb[0].mxu0 %v634
    %v710 = vpop.f32.mrb[0].mxu0
    %v711 = vadd.f32 0.0, %v710
    %v712 = vpop.f32.mrb[0].mxu0
    %v713 = vadd.f32 0.0, %v712
    %v714 = vpop.f32.mrb[0].mxu0
    %v715 = vpop.f32.mrb[0].mxu0
    %716 = vdwg.mxu0
    %v717 = vadd.f32 %v630, %v670
    %v718 = vadd.f32 %v631, %v672
    %v719 = vadd.f32 %v632, %v711
    %v720 = vadd.f32 %v633, %v713
    %v721 = vxor.u32 %v717, 2147483648
    %v722 = vxor.u32 %v718, 2147483648
    %v723 = vxor.u32 %v719, 2147483648
    %v724 = vmul.f32 %v721, 1.442695
    %v725 = vpow.pop %v724
    %v726 = vmul.f32 %v722, 1.442695
    %v727 = vpow.pop %v726
    %v728 = vmul.f32 %v723, 1.442695
    %v729 = vpow.pop %v728
    %v730 = vadd.f32 %v725, 1.0
    %v731 = vadd.f32 %v727, 1.0
    %v732 = vadd.f32 %v729, 1.0
    %v733 = vrcp.pop %v730
    %v734 = vmul.f32 1.0, %v733
    %v735 = vrcp.pop %v731
    %v736 = vmul.f32 1.0, %v735
    %v737 = vrcp.pop %v732
    %v738 = vmul.f32 1.0, %v737
    %v739 = vtanh.pop %v720
    %v740 = vmul.f32 %v736, %v623
    %v741 = vmul.f32 %v734, %v739
    %v742 = vadd.f32 %v740, %v741
    %v743 = vtanh.pop %v742
    %v744 = vmul.f32 %v738, %v743
    %v745 = vadd.f32 %v626, %v744
    %s746 = smul.u32 2, 4
    %s747 = smul.addr %s746, 8
    %s748 = scalar_lea.vmem [#allocation2], %s747
    %v749 = vld [vmem:[%s748] sm:$0xff]
    %v750 = vld [vmem:[%s748 + $0x8] sm:$0xff]
    %v751 = vld [vmem:[%s748 + $0x10] sm:$0xff]
    %v752 = vld [vmem:[%s748 + $0x18] sm:$0xff]
    %v753 = vpack.c.bf16 %v744, %v744
    %754 = vmatprep.subr.bf16.mxu0 %v453
    %755 = vmatpush1.bf16.msra.mxu0 %v452
    %756 = vmatprep.subr.bf16.mxu0 %v457
    %757 = vmatpush1.bf16.msra.mxu0 %v456
    %758 = vmatprep.subr.bf16.mxu0 %v461
    %759 = vmatpush1.bf16.msra.mxu0 %v460
    %760 = vmatprep.subr.bf16.mxu0 %v465
    %761 = vmatpush1.bf16.msra.mxu0 %v464
    %762 = vmatprep.subr.bf16.mxu0 %v469
    %763 = vmatpush1.bf16.msra.mxu0 %v468
    %764 = vmatprep.subr.bf16.mxu0 %v473
    %765 = vmatpush1.bf16.msra.mxu0 %v472
    %766 = vmatprep.subr.bf16.mxu0 %v477
    %767 = vmatpush1.bf16.msra.mxu0 %v476
    %768 = vmatprep.subr.bf16.mxu0 %v481
    %769 = vmatpush1.bf16.msra.mxu0 %v480
    %770 = vmatprep.subr.bf16.mxu0 0
    %771 = vmatpush1.bf16.msra.mxu0 0
    %772 = vmatprep.subr.bf16.mxu0 0
    %773 = vmatpush1.bf16.msra.mxu0 0
    %774 = vmatprep.subr.bf16.mxu0 0
    %775 = vmatpush1.bf16.msra.mxu0 0
    %776 = vmatprep.subr.bf16.mxu0 0
    %777 = vmatpush1.bf16.msra.mxu0 0
    %778 = vmatprep.subr.bf16.mxu0 0
    %779 = vmatpush1.bf16.msra.mxu0 0
    %780 = vmatprep.subr.bf16.mxu0 0
    %781 = vmatpush1.bf16.msra.mxu0 0
    %782 = vmatprep.subr.bf16.mxu0 0
    %783 = vmatpush1.bf16.msra.mxu0 0
    %784 = vmatprep.subr.bf16.mxu0 0
    %785 = vmatpush1.bf16.msra.mxu0 0
    %786 = vmatprep.mubr.bf16.mxu0 0
    %787 = vmatmul.mubr.bf16.gmra.mrb[0].mxu0 %v753
    %v788 = vpop.f32.mrb[0].mxu0
    %v789 = vadd.f32 0.0, %v788
    %v790 = vpop.f32.mrb[0].mxu0
    %v791 = vadd.f32 0.0, %v790
    %v792 = vpop.f32.mrb[0].mxu0
    %v793 = vpop.f32.mrb[0].mxu0
    %794 = vdwg.mxu0
    %795 = vmatprep.subr.bf16.mxu0 %v455
    %796 = vmatpush1.bf16.msra.mxu0 %v454
    %797 = vmatprep.subr.bf16.mxu0 %v459
    %798 = vmatpush1.bf16.msra.mxu0 %v458
    %799 = vmatprep.subr.bf16.mxu0 %v463
    %800 = vmatpush1.bf16.msra.mxu0 %v462
    %801 = vmatprep.subr.bf16.mxu0 %v467
    %802 = vmatpush1.bf16.msra.mxu0 %v466
    %803 = vmatprep.subr.bf16.mxu0 %v471
    %804 = vmatpush1.bf16.msra.mxu0 %v470
    %805 = vmatprep.subr.bf16.mxu0 %v475
    %806 = vmatpush1.bf16.msra.mxu0 %v474
    %807 = vmatprep.subr.bf16.mxu0 %v479
    %808 = vmatpush1.bf16.msra.mxu0 %v478
    %809 = vmatprep.subr.bf16.mxu0 %v483
    %810 = vmatpush1.bf16.msra.mxu0 %v482
    %811 = vmatprep.subr.bf16.mxu0 0
    %812 = vmatpush1.bf16.msra.mxu0 0
    %813 = vmatprep.subr.bf16.mxu0 0
    %814 = vmatpush1.bf16.msra.mxu0 0
    %815 = vmatprep.subr.bf16.mxu0 0
    %816 = vmatpush1.bf16.msra.mxu0 0
    %817 = vmatprep.subr.bf16.mxu0 0
    %818 = vmatpush1.bf16.msra.mxu0 0
    %819 = vmatprep.subr.bf16.mxu0 0
    %820 = vmatpush1.bf16.msra.mxu0 0
    %821 = vmatprep.subr.bf16.mxu0 0
    %822 = vmatpush1.bf16.msra.mxu0 0
    %823 = vmatprep.subr.bf16.mxu0 0
    %824 = vmatpush1.bf16.msra.mxu0 0
    %825 = vmatprep.subr.bf16.mxu0 0
    %826 = vmatpush1.bf16.msra.mxu0 0
    %827 = vmatprep.mubr.bf16.mxu0 0
    %828 = vmatmul.mubr.bf16.gmra.mrb[0].mxu0 %v753
    %v829 = vpop.f32.mrb[0].mxu0
    %v830 = vadd.f32 0.0, %v829
    %v831 = vpop.f32.mrb[0].mxu0
    %v832 = vadd.f32 0.0, %v831
    %v833 = vpop.f32.mrb[0].mxu0
    %v834 = vpop.f32.mrb[0].mxu0
    %835 = vdwg.mxu0
    %v836 = vadd.f32 %v749, %v789
    %v837 = vadd.f32 %v750, %v791
    %v838 = vadd.f32 %v751, %v830
    %v839 = vadd.f32 %v752, %v832
    %v840 = vxor.u32 %v836, 2147483648
    %v841 = vxor.u32 %v837, 2147483648
    %v842 = vxor.u32 %v838, 2147483648
    %v843 = vmul.f32 %v840, 1.442695
    %v844 = vpow.pop %v843
    %v845 = vmul.f32 %v841, 1.442695
    %v846 = vpow.pop %v845
    %v847 = vmul.f32 %v842, 1.442695
    %v848 = vpow.pop %v847
    %v849 = vadd.f32 %v844, 1.0
    %v850 = vadd.f32 %v846, 1.0
    %v851 = vadd.f32 %v848, 1.0
    %v852 = vrcp.pop %v849
    %v853 = vmul.f32 1.0, %v852
    %v854 = vrcp.pop %v850
    %v855 = vmul.f32 1.0, %v854
    %v856 = vrcp.pop %v851
    %v857 = vmul.f32 1.0, %v856
    %v858 = vtanh.pop %v839
    %v859 = vmul.f32 %v855, %v742
    %v860 = vmul.f32 %v853, %v858
    %v861 = vadd.f32 %v859, %v860
    %v862 = vtanh.pop %v861
    %v863 = vmul.f32 %v857, %v862
    %v864 = vadd.f32 %v745, %v863
    %s865 = smul.u32 3, 4
    %s866 = smul.addr %s865, 8
    %s867 = scalar_lea.vmem [#allocation2], %s866
    %v868 = vld [vmem:[%s867] sm:$0xff]
    %v869 = vld [vmem:[%s867 + $0x8] sm:$0xff]
    %v870 = vld [vmem:[%s867 + $0x10] sm:$0xff]
    %v871 = vld [vmem:[%s867 + $0x18] sm:$0xff]
    %v872 = vpack.c.bf16 %v863, %v863
    %873 = vmatprep.subr.bf16.mxu0 %v453
    %874 = vmatpush1.bf16.msra.mxu0 %v452
    %875 = vmatprep.subr.bf16.mxu0 %v457
    %876 = vmatpush1.bf16.msra.mxu0 %v456
    %877 = vmatprep.subr.bf16.mxu0 %v461
    %878 = vmatpush1.bf16.msra.mxu0 %v460
    %879 = vmatprep.subr.bf16.mxu0 %v465
    %880 = vmatpush1.bf16.msra.mxu0 %v464
    %881 = vmatprep.subr.bf16.mxu0 %v469
    %882 = vmatpush1.bf16.msra.mxu0 %v468
    %883 = vmatprep.subr.bf16.mxu0 %v473
    %884 = vmatpush1.bf16.msra.mxu0 %v472
    %885 = vmatprep.subr.bf16.mxu0 %v477
    %886 = vmatpush1.bf16.msra.mxu0 %v476
    %887 = vmatprep.subr.bf16.mxu0 %v481
    %888 = vmatpush1.bf16.msra.mxu0 %v480
    %889 = vmatprep.subr.bf16.mxu0 0
    %890 = vmatpush1.bf16.msra.mxu0 0
    %891 = vmatprep.subr.bf16.mxu0 0
    %892 = vmatpush1.bf16.msra.mxu0 0
    %893 = vmatprep.subr.bf16.mxu0 0
    %894 = vmatpush1.bf16.msra.mxu0 0
    %895 = vmatprep.subr.bf16.mxu0 0
    %896 = vmatpush1.bf16.msra.mxu0 0
    %897 = vmatprep.subr.bf16.mxu0 0
    %898 = vmatpush1.bf16.msra.mxu0 0
    %899 = vmatprep.subr.bf16.mxu0 0
    %900 = vmatpush1.bf16.msra.mxu0 0
    %901 = vmatprep.subr.bf16.mxu0 0
    %902 = vmatpush1.bf16.msra.mxu0 0
    %903 = vmatprep.subr.bf16.mxu0 0
    %904 = vmatpush1.bf16.msra.mxu0 0
    %905 = vmatprep.mubr.bf16.mxu0 0
    %906 = vmatmul.mubr.bf16.gmra.mrb[0].mxu0 %v872
    %v907 = vpop.f32.mrb[0].mxu0
    %v908 = vadd.f32 0.0, %v907
    %v909 = vpop.f32.mrb[0].mxu0
    %v910 = vadd.f32 0.0, %v909
    %v911 = vpop.f32.mrb[0].mxu0
    %v912 = vpop.f32.mrb[0].mxu0
    %913 = vdwg.mxu0
    %914 = vmatprep.subr.bf16.mxu0 %v455
    %915 = vmatpush1.bf16.msra.mxu0 %v454
    %916 = vmatprep.subr.bf16.mxu0 %v459
    %917 = vmatpush1.bf16.msra.mxu0 %v458
    %918 = vmatprep.subr.bf16.mxu0 %v463
    %919 = vmatpush1.bf16.msra.mxu0 %v462
    %920 = vmatprep.subr.bf16.mxu0 %v467
    %921 = vmatpush1.bf16.msra.mxu0 %v466
    %922 = vmatprep.subr.bf16.mxu0 %v471
    %923 = vmatpush1.bf16.msra.mxu0 %v470
    %924 = vmatprep.subr.bf16.mxu0 %v475
    %925 = vmatpush1.bf16.msra.mxu0 %v474
    %926 = vmatprep.subr.bf16.mxu0 %v479
    %927 = vmatpush1.bf16.msra.mxu0 %v478
    %928 = vmatprep.subr.bf16.mxu0 %v483
    %929 = vmatpush1.bf16.msra.mxu0 %v482
    %930 = vmatprep.subr.bf16.mxu0 0
    %931 = vmatpush1.bf16.msra.mxu0 0
    %932 = vmatprep.subr.bf16.mxu0 0
    %933 = vmatpush1.bf16.msra.mxu0 0
    %934 = vmatprep.subr.bf16.mxu0 0
    %935 = vmatpush1.bf16.msra.mxu0 0
    %936 = vmatprep.subr.bf16.mxu0 0
    %937 = vmatpush1.bf16.msra.mxu0 0
    %938 = vmatprep.subr.bf16.mxu0 0
    %939 = vmatpush1.bf16.msra.mxu0 0
    %940 = vmatprep.subr.bf16.mxu0 0
    %941 = vmatpush1.bf16.msra.mxu0 0
    %942 = vmatprep.subr.bf16.mxu0 0
    %943 = vmatpush1.bf16.msra.mxu0 0
    %944 = vmatprep.subr.bf16.mxu0 0
    %945 = vmatpush1.bf16.msra.mxu0 0
    %946 = vmatprep.mubr.bf16.mxu0 0
    %947 = vmatmul.mubr.bf16.gmra.mrb[0].mxu0 %v872
    %v948 = vpop.f32.mrb[0].mxu0
    %v949 = vadd.f32 0.0, %v948
    %v950 = vpop.f32.mrb[0].mxu0
    %v951 = vadd.f32 0.0, %v950
    %v952 = vpop.f32.mrb[0].mxu0
    %v953 = vpop.f32.mrb[0].mxu0
    %954 = vdwg.mxu0
    %v955 = vadd.f32 %v868, %v908
    %v956 = vadd.f32 %v869, %v910
    %v957 = vadd.f32 %v870, %v949
    %v958 = vadd.f32 %v871, %v951
    %v959 = vxor.u32 %v955, 2147483648
    %v960 = vxor.u32 %v956, 2147483648
    %v961 = vxor.u32 %v957, 2147483648
    %v962 = vmul.f32 %v959, 1.442695
    %v963 = vpow.pop %v962
    %v964 = vmul.f32 %v960, 1.442695
    %v965 = vpow.pop %v964
    %v966 = vmul.f32 %v961, 1.442695
    %v967 = vpow.pop %v966
    %v968 = vadd.f32 %v963, 1.0
    %v969 = vadd.f32 %v965, 1.0
    %v970 = vadd.f32 %v967, 1.0
    %v971 = vrcp.pop %v968
    %v972 = vmul.f32 1.0, %v971
    %v973 = vrcp.pop %v969
    %v974 = vmul.f32 1.0, %v973
    %v975 = vrcp.pop %v970
    %v976 = vmul.f32 1.0, %v975
    %v977 = vtanh.pop %v958
    %v978 = vmul.f32 %v974, %v861
    %v979 = vmul.f32 %v972, %v977
    %v980 = vadd.f32 %v978, %v979
    %v981 = vtanh.pop %v980
    %v982 = vmul.f32 %v976, %v981
    %v983 = vadd.f32 %v864, %v982
    %s984 = smul.u32 4, 4
    %s985 = smul.addr %s984, 8
    %s986 = scalar_lea.vmem [#allocation2], %s985
    %v987 = vld [vmem:[%s986] sm:$0xff]
    %v988 = vld [vmem:[%s986 + $0x8] sm:$0xff]
    %v989 = vld [vmem:[%s986 + $0x10] sm:$0xff]
    %v990 = vld [vmem:[%s986 + $0x18] sm:$0xff]
    %v991 = vpack.c.bf16 %v982, %v982
    %992 = vmatprep.subr.bf16.mxu0 %v453
    %993 = vmatpush1.bf16.msra.mxu0 %v452
    %994 = vmatprep.subr.bf16.mxu0 %v457
    %995 = vmatpush1.bf16.msra.mxu0 %v456
    %996 = vmatprep.subr.bf16.mxu0 %v461
    %997 = vmatpush1.bf16.msra.mxu0 %v460
    %998 = vmatprep.subr.bf16.mxu0 %v465
    %999 = vmatpush1.bf16.msra.mxu0 %v464
    %1000 = vmatprep.subr.bf16.mxu0 %v469
    %1001 = vmatpush1.bf16.msra.mxu0 %v468
    %1002 = vmatprep.subr.bf16.mxu0 %v473
    %1003 = vmatpush1.bf16.msra.mxu0 %v472
    %1004 = vmatprep.subr.bf16.mxu0 %v477
    %1005 = vmatpush1.bf16.msra.mxu0 %v476
    %1006 = vmatprep.subr.bf16.mxu0 %v481
    %1007 = vmatpush1.bf16.msra.mxu0 %v480
    %1008 = vmatprep.subr.bf16.mxu0 0
    %1009 = vmatpush1.bf16.msra.mxu0 0
    %1010 = vmatprep.subr.bf16.mxu0 0
    %1011 = vmatpush1.bf16.msra.mxu0 0
    %1012 = vmatprep.subr.bf16.mxu0 0
    %1013 = vmatpush1.bf16.msra.mxu0 0
    %1014 = vmatprep.subr.bf16.mxu0 0
    %1015 = vmatpush1.bf16.msra.mxu0 0
    %1016 = vmatprep.subr.bf16.mxu0 0
    %1017 = vmatpush1.bf16.msra.mxu0 0
    %1018 = vmatprep.subr.bf16.mxu0 0
    %1019 = vmatpush1.bf16.msra.mxu0 0
    %1020 = vmatprep.subr.bf16.mxu0 0
    %1021 = vmatpush1.bf16.msra.mxu0 0
    %1022 = vmatprep.subr.bf16.mxu0 0
    %1023 = vmatpush1.bf16.msra.mxu0 0
    %1024 = vmatprep.mubr.bf16.mxu0 0
    %1025 = vmatmul.mubr.bf16.gmra.mrb[0].mxu0 %v991
    %v1026 = vpop.f32.mrb[0].mxu0
    %v1027 = vadd.f32 0.0, %v1026
    %v1028 = vpop.f32.mrb[0].mxu0
    %v1029 = vadd.f32 0.0, %v1028
    %v1030 = vpop.f32.mrb[0].mxu0
    %v1031 = vpop.f32.mrb[0].mxu0
    %1032 = vdwg.mxu0
    %1033 = vmatprep.subr.bf16.mxu0 %v455
    %1034 = vmatpush1.bf16.msra.mxu0 %v454
    %1035 = vmatprep.subr.bf16.mxu0 %v459
    %1036 = vmatpush1.bf16.msra.mxu0 %v458
    %1037 = vmatprep.subr.bf16.mxu0 %v463
    %1038 = vmatpush1.bf16.msra.mxu0 %v462
    %1039 = vmatprep.subr.bf16.mxu0 %v467
    %1040 = vmatpush1.bf16.msra.mxu0 %v466
    %1041 = vmatprep.subr.bf16.mxu0 %v471
    %1042 = vmatpush1.bf16.msra.mxu0 %v470
    %1043 = vmatprep.subr.bf16.mxu0 %v475
    %1044 = vmatpush1.bf16.msra.mxu0 %v474
    %1045 = vmatprep.subr.bf16.mxu0 %v479
    %1046 = vmatpush1.bf16.msra.mxu0 %v478
    %1047 = vmatprep.subr.bf16.mxu0 %v483
    %1048 = vmatpush1.bf16.msra.mxu0 %v482
    %1049 = vmatprep.subr.bf16.mxu0 0
    %1050 = vmatpush1.bf16.msra.mxu0 0
    %1051 = vmatprep.subr.bf16.mxu0 0
    %1052 = vmatpush1.bf16.msra.mxu0 0
    %1053 = vmatprep.subr.bf16.mxu0 0
    %1054 = vmatpush1.bf16.msra.mxu0 0
    %1055 = vmatprep.subr.bf16.mxu0 0
    %1056 = vmatpush1.bf16.msra.mxu0 0
    %1057 = vmatprep.subr.bf16.mxu0 0
    %1058 = vmatpush1.bf16.msra.mxu0 0
    %1059 = vmatprep.subr.bf16.mxu0 0
    %1060 = vmatpush1.bf16.msra.mxu0 0
    %1061 = vmatprep.subr.bf16.mxu0 0
    %1062 = vmatpush1.bf16.msra.mxu0 0
    %1063 = vmatprep.subr.bf16.mxu0 0
    %1064 = vmatpush1.bf16.msra.mxu0 0
    %1065 = vmatprep.mubr.bf16.mxu0 0
    %1066 = vmatmul.mubr.bf16.gmra.mrb[0].mxu0 %v991
    %v1067 = vpop.f32.mrb[0].mxu0
    %v1068 = vadd.f32 0.0, %v1067
    %v1069 = vpop.f32.mrb[0].mxu0
    %v1070 = vadd.f32 0.0, %v1069
    %v1071 = vpop.f32.mrb[0].mxu0
    %v1072 = vpop.f32.mrb[0].mxu0
    %1073 = vdwg.mxu0
    %v1074 = vadd.f32 %v987, %v1027
    %v1075 = vadd.f32 %v988, %v1029
    %v1076 = vadd.f32 %v989, %v1068
    %v1077 = vadd.f32 %v990, %v1070
    %v1078 = vxor.u32 %v1074, 2147483648
    %v1079 = vxor.u32 %v1075, 2147483648
    %v1080 = vxor.u32 %v1076, 2147483648
    %v1081 = vmul.f32 %v1078, 1.442695
    %v1082 = vpow.pop %v1081
    %v1083 = vmul.f32 %v1079, 1.442695
    %v1084 = vpow.pop %v1083
    %v1085 = vmul.f32 %v1080, 1.442695
    %v1086 = vpow.pop %v1085
    %v1087 = vadd.f32 %v1082, 1.0
    %v1088 = vadd.f32 %v1084, 1.0
    %v1089 = vadd.f32 %v1086, 1.0
    %v1090 = vrcp.pop %v1087
    %v1091 = vmul.f32 1.0, %v1090
    %v1092 = vrcp.pop %v1088
    %v1093 = vmul.f32 1.0, %v1092
    %v1094 = vrcp.pop %v1089
    %v1095 = vmul.f32 1.0, %v1094
    %v1096 = vtanh.pop %v1077
    %v1097 = vmul.f32 %v1093, %v980
    %v1098 = vmul.f32 %v1091, %v1096
    %v1099 = vadd.f32 %v1097, %v1098
    %v1100 = vtanh.pop %v1099
    %v1101 = vmul.f32 %v1095, %v1100
    %v1102 = vadd.f32 %v983, %v1101
    %s1103 = smul.u32 5, 4
    %s1104 = smul.addr %s1103, 8
    %s1105 = scalar_lea.vmem [#allocation2], %s1104
    %v1106 = vld [vmem:[%s1105] sm:$0xff]
    %v1107 = vld [vmem:[%s1105 + $0x8] sm:$0xff]
    %v1108 = vld [vmem:[%s1105 + $0x10] sm:$0xff]
    %v1109 = vld [vmem:[%s1105 + $0x18] sm:$0xff]
    %v1110 = vpack.c.bf16 %v1101, %v1101
    %1111 = vmatprep.subr.bf16.mxu0 %v453
    %1112 = vmatpush1.bf16.msra.mxu0 %v452
    %1113 = vmatprep.subr.bf16.mxu0 %v457
    %1114 = vmatpush1.bf16.msra.mxu0 %v456
    %1115 = vmatprep.subr.bf16.mxu0 %v461
    %1116 = vmatpush1.bf16.msra.mxu0 %v460
    %1117 = vmatprep.subr.bf16.mxu0 %v465
    %1118 = vmatpush1.bf16.msra.mxu0 %v464
    %1119 = vmatprep.subr.bf16.mxu0 %v469
    %1120 = vmatpush1.bf16.msra.mxu0 %v468
    %1121 = vmatprep.subr.bf16.mxu0 %v473
    %1122 = vmatpush1.bf16.msra.mxu0 %v472
    %1123 = vmatprep.subr.bf16.mxu0 %v477
    %1124 = vmatpush1.bf16.msra.mxu0 %v476
    %1125 = vmatprep.subr.bf16.mxu0 %v481
    %1126 = vmatpush1.bf16.msra.mxu0 %v480
    %1127 = vmatprep.subr.bf16.mxu0 0
    %1128 = vmatpush1.bf16.msra.mxu0 0
    %1129 = vmatprep.subr.bf16.mxu0 0
    %1130 = vmatpush1.bf16.msra.mxu0 0
    %1131 = vmatprep.subr.bf16.mxu0 0
    %1132 = vmatpush1.bf16.msra.mxu0 0
    %1133 = vmatprep.subr.bf16.mxu0 0
    %1134 = vmatpush1.bf16.msra.mxu0 0
    %1135 = vmatprep.subr.bf16.mxu0 0
    %1136 = vmatpush1.bf16.msra.mxu0 0
    %1137 = vmatprep.subr.bf16.mxu0 0
    %1138 = vmatpush1.bf16.msra.mxu0 0
    %1139 = vmatprep.subr.bf16.mxu0 0
    %1140 = vmatpush1.bf16.msra.mxu0 0
    %1141 = vmatprep.subr.bf16.mxu0 0
    %1142 = vmatpush1.bf16.msra.mxu0 0
    %1143 = vmatprep.mubr.bf16.mxu0 0
    %1144 = vmatmul.mubr.bf16.gmra.mrb[0].mxu0 %v1110
    %v1145 = vpop.f32.mrb[0].mxu0
    %v1146 = vadd.f32 0.0, %v1145
    %v1147 = vpop.f32.mrb[0].mxu0
    %v1148 = vadd.f32 0.0, %v1147
    %v1149 = vpop.f32.mrb[0].mxu0
    %v1150 = vpop.f32.mrb[0].mxu0
    %1151 = vdwg.mxu0
    %1152 = vmatprep.subr.bf16.mxu0 %v455
    %1153 = vmatpush1.bf16.msra.mxu0 %v454
    %1154 = vmatprep.subr.bf16.mxu0 %v459
    %1155 = vmatpush1.bf16.msra.mxu0 %v458
    %1156 = vmatprep.subr.bf16.mxu0 %v463
    %1157 = vmatpush1.bf16.msra.mxu0 %v462
    %1158 = vmatprep.subr.bf16.mxu0 %v467
    %1159 = vmatpush1.bf16.msra.mxu0 %v466
    %1160 = vmatprep.subr.bf16.mxu0 %v471
    %1161 = vmatpush1.bf16.msra.mxu0 %v470
    %1162 = vmatprep.subr.bf16.mxu0 %v475
    %1163 = vmatpush1.bf16.msra.mxu0 %v474
    %1164 = vmatprep.subr.bf16.mxu0 %v479
    %1165 = vmatpush1.bf16.msra.mxu0 %v478
    %1166 = vmatprep.subr.bf16.mxu0 %v483
    %1167 = vmatpush1.bf16.msra.mxu0 %v482
    %1168 = vmatprep.subr.bf16.mxu0 0
    %1169 = vmatpush1.bf16.msra.mxu0 0
    %1170 = vmatprep.subr.bf16.mxu0 0
    %1171 = vmatpush1.bf16.msra.mxu0 0
    %1172 = vmatprep.subr.bf16.mxu0 0
    %1173 = vmatpush1.bf16.msra.mxu0 0
    %1174 = vmatprep.subr.bf16.mxu0 0
    %1175 = vmatpush1.bf16.msra.mxu0 0
    %1176 = vmatprep.subr.bf16.mxu0 0
    %1177 = vmatpush1.bf16.msra.mxu0 0
    %1178 = vmatprep.subr.bf16.mxu0 0
    %1179 = vmatpush1.bf16.msra.mxu0 0
    %1180 = vmatprep.subr.bf16.mxu0 0
    %1181 = vmatpush1.bf16.msra.mxu0 0
    %1182 = vmatprep.subr.bf16.mxu0 0
    %1183 = vmatpush1.bf16.msra.mxu0 0
    %1184 = vmatprep.mubr.bf16.mxu0 0
    %1185 = vmatmul.mubr.bf16.gmra.mrb[0].mxu0 %v1110
    %v1186 = vpop.f32.mrb[0].mxu0
    %v1187 = vadd.f32 0.0, %v1186
    %v1188 = vpop.f32.mrb[0].mxu0
    %v1189 = vadd.f32 0.0, %v1188
    %v1190 = vpop.f32.mrb[0].mxu0
    %v1191 = vpop.f32.mrb[0].mxu0
    %1192 = vdwg.mxu0
    %v1193 = vadd.f32 %v1106, %v1146
    %v1194 = vadd.f32 %v1107, %v1148
    %v1195 = vadd.f32 %v1108, %v1187
    %v1196 = vadd.f32 %v1109, %v1189
    %v1197 = vxor.u32 %v1193, 2147483648
    %v1198 = vxor.u32 %v1194, 2147483648
    %v1199 = vxor.u32 %v1195, 2147483648
    %v1200 = vmul.f32 %v1197, 1.442695
    %v1201 = vpow.pop %v1200
    %v1202 = vmul.f32 %v1198, 1.442695
    %v1203 = vpow.pop %v1202
    %v1204 = vmul.f32 %v1199, 1.442695
    %v1205 = vpow.pop %v1204
    %v1206 = vadd.f32 %v1201, 1.0
    %v1207 = vadd.f32 %v1203, 1.0
    %v1208 = vadd.f32 %v1205, 1.0
    %v1209 = vrcp.pop %v1206
    %v1210 = vmul.f32 1.0, %v1209
    %v1211 = vrcp.pop %v1207
    %v1212 = vmul.f32 1.0, %v1211
    %v1213 = vrcp.pop %v1208
    %v1214 = vmul.f32 1.0, %v1213
    %v1215 = vtanh.pop %v1196
    %v1216 = vmul.f32 %v1212, %v1099
    %v1217 = vmul.f32 %v1210, %v1215
    %v1218 = vadd.f32 %v1216, %v1217
    %v1219 = vtanh.pop %v1218
    %v1220 = vmul.f32 %v1214, %v1219
    %v1221 = vadd.f32 %v1102, %v1220
    %s1222 = smul.u32 6, 4
    %s1223 = smul.addr %s1222, 8
    %s1224 = scalar_lea.vmem [#allocation2], %s1223
    %v1225 = vld [vmem:[%s1224] sm:$0xff]
    %v1226 = vld [vmem:[%s1224 + $0x8] sm:$0xff]
    %v1227 = vld [vmem:[%s1224 + $0x10] sm:$0xff]
    %v1228 = vld [vmem:[%s1224 + $0x18] sm:$0xff]
    %v1229 = vpack.c.bf16 %v1220, %v1220
    %1230 = vmatprep.subr.bf16.mxu0 %v453
    %1231 = vmatpush1.bf16.msra.mxu0 %v452
    %1232 = vmatprep.subr.bf16.mxu0 %v457
    %1233 = vmatpush1.bf16.msra.mxu0 %v456
    %1234 = vmatprep.subr.bf16.mxu0 %v461
    %1235 = vmatpush1.bf16.msra.mxu0 %v460
    %1236 = vmatprep.subr.bf16.mxu0 %v465
    %1237 = vmatpush1.bf16.msra.mxu0 %v464
    %1238 = vmatprep.subr.bf16.mxu0 %v469
    %1239 = vmatpush1.bf16.msra.mxu0 %v468
    %1240 = vmatprep.subr.bf16.mxu0 %v473
    %1241 = vmatpush1.bf16.msra.mxu0 %v472
    %1242 = vmatprep.subr.bf16.mxu0 %v477
    %1243 = vmatpush1.bf16.msra.mxu0 %v476
    %1244 = vmatprep.subr.bf16.mxu0 %v481
    %1245 = vmatpush1.bf16.msra.mxu0 %v480
    %1246 = vmatprep.subr.bf16.mxu0 0
    %1247 = vmatpush1.bf16.msra.mxu0 0
    %1248 = vmatprep.subr.bf16.mxu0 0
    %1249 = vmatpush1.bf16.msra.mxu0 0
    %1250 = vmatprep.subr.bf16.mxu0 0
    %1251 = vmatpush1.bf16.msra.mxu0 0
    %1252 = vmatprep.subr.bf16.mxu0 0
    %1253 = vmatpush1.bf16.msra.mxu0 0
    %1254 = vmatprep.subr.bf16.mxu0 0
    %1255 = vmatpush1.bf16.msra.mxu0 0
    %1256 = vmatprep.subr.bf16.mxu0 0
    %1257 = vmatpush1.bf16.msra.mxu0 0
    %1258 = vmatprep.subr.bf16.mxu0 0
    %1259 = vmatpush1.bf16.msra.mxu0 0
    %1260 = vmatprep.subr.bf16.mxu0 0
    %1261 = vmatpush1.bf16.msra.mxu0 0
    %1262 = vmatprep.mubr.bf16.mxu0 0
    %1263 = vmatmul.mubr.bf16.gmra.mrb[0].mxu0 %v1229
    %v1264 = vpop.f32.mrb[0].mxu0
    %v1265 = vadd.f32 0.0, %v1264
    %v1266 = vpop.f32.mrb[0].mxu0
    %v1267 = vadd.f32 0.0, %v1266
    %v1268 = vpop.f32.mrb[0].mxu0
    %v1269 = vpop.f32.mrb[0].mxu0
    %1270 = vdwg.mxu0
    %1271 = vmatprep.subr.bf16.mxu0 %v455
    %1272 = vmatpush1.bf16.msra.mxu0 %v454
    %1273 = vmatprep.subr.bf16.mxu0 %v459
    %1274 = vmatpush1.bf16.msra.mxu0 %v458
    %1275 = vmatprep.subr.bf16.mxu0 %v463
    %1276 = vmatpush1.bf16.msra.mxu0 %v462
    %1277 = vmatprep.subr.bf16.mxu0 %v467
    %1278 = vmatpush1.bf16.msra.mxu0 %v466
    %1279 = vmatprep.subr.bf16.mxu0 %v471
    %1280 = vmatpush1.bf16.msra.mxu0 %v470
    %1281 = vmatprep.subr.bf16.mxu0 %v475
    %1282 = vmatpush1.bf16.msra.mxu0 %v474
    %1283 = vmatprep.subr.bf16.mxu0 %v479
    %1284 = vmatpush1.bf16.msra.mxu0 %v478
    %1285 = vmatprep.subr.bf16.mxu0 %v483
    %1286 = vmatpush1.bf16.msra.mxu0 %v482
    %1287 = vmatprep.subr.bf16.mxu0 0
    %1288 = vmatpush1.bf16.msra.mxu0 0
    %1289 = vmatprep.subr.bf16.mxu0 0
    %1290 = vmatpush1.bf16.msra.mxu0 0
    %1291 = vmatprep.subr.bf16.mxu0 0
    %1292 = vmatpush1.bf16.msra.mxu0 0
    %1293 = vmatprep.subr.bf16.mxu0 0
    %1294 = vmatpush1.bf16.msra.mxu0 0
    %1295 = vmatprep.subr.bf16.mxu0 0
    %1296 = vmatpush1.bf16.msra.mxu0 0
    %1297 = vmatprep.subr.bf16.mxu0 0
    %1298 = vmatpush1.bf16.msra.mxu0 0
    %1299 = vmatprep.subr.bf16.mxu0 0
    %1300 = vmatpush1.bf16.msra.mxu0 0
    %1301 = vmatprep.subr.bf16.mxu0 0
    %1302 = vmatpush1.bf16.msra.mxu0 0
    %1303 = vmatprep.mubr.bf16.mxu0 0
    %1304 = vmatmul.mubr.bf16.gmra.mrb[0].mxu0 %v1229
    %v1305 = vpop.f32.mrb[0].mxu0
    %v1306 = vadd.f32 0.0, %v1305
    %v1307 = vpop.f32.mrb[0].mxu0
    %v1308 = vadd.f32 0.0, %v1307
    %v1309 = vpop.f32.mrb[0].mxu0
    %v1310 = vpop.f32.mrb[0].mxu0
    %1311 = vdwg.mxu0
    %v1312 = vadd.f32 %v1225, %v1265
    %v1313 = vadd.f32 %v1226, %v1267
    %v1314 = vadd.f32 %v1227, %v1306
    %v1315 = vadd.f32 %v1228, %v1308
    %v1316 = vxor.u32 %v1312, 2147483648
    %v1317 = vxor.u32 %v1313, 2147483648
    %v1318 = vxor.u32 %v1314, 2147483648
    %v1319 = vmul.f32 %v1316, 1.442695
    %v1320 = vpow.pop %v1319
    %v1321 = vmul.f32 %v1317, 1.442695
    %v1322 = vpow.pop %v1321
    %v1323 = vmul.f32 %v1318, 1.442695
    %v1324 = vpow.pop %v1323
    %v1325 = vadd.f32 %v1320, 1.0
    %v1326 = vadd.f32 %v1322, 1.0
    %v1327 = vadd.f32 %v1324, 1.0
    %v1328 = vrcp.pop %v1325
    %v1329 = vmul.f32 1.0, %v1328
    %v1330 = vrcp.pop %v1326
    %v1331 = vmul.f32 1.0, %v1330
    %v1332 = vrcp.pop %v1327
    %v1333 = vmul.f32 1.0, %v1332
    %v1334 = vtanh.pop %v1315
    %v1335 = vmul.f32 %v1331, %v1218
    %v1336 = vmul.f32 %v1329, %v1334
    %v1337 = vadd.f32 %v1335, %v1336
    %v1338 = vtanh.pop %v1337
    %v1339 = vmul.f32 %v1333, %v1338
    %v1340 = vadd.f32 %v1221, %v1339
    %s1341 = smul.u32 7, 4
    %s1342 = smul.addr %s1341, 8
    %s1343 = scalar_lea.vmem [#allocation2], %s1342
    %v1344 = vld [vmem:[%s1343] sm:$0xff]
    %v1345 = vld [vmem:[%s1343 + $0x8] sm:$0xff]
    %v1346 = vld [vmem:[%s1343 + $0x10] sm:$0xff]
    %v1347 = vld [vmem:[%s1343 + $0x18] sm:$0xff]
    %v1348 = vpack.c.bf16 %v1339, %v1339
    %1349 = vmatprep.subr.bf16.mxu0 %v453
    %1350 = vmatpush1.bf16.msra.mxu0 %v452
    %1351 = vmatprep.subr.bf16.mxu0 %v457
    %1352 = vmatpush1.bf16.msra.mxu0 %v456
    %1353 = vmatprep.subr.bf16.mxu0 %v461
    %1354 = vmatpush1.bf16.msra.mxu0 %v460
    %1355 = vmatprep.subr.bf16.mxu0 %v465
    %1356 = vmatpush1.bf16.msra.mxu0 %v464
    %1357 = vmatprep.subr.bf16.mxu0 %v469
    %1358 = vmatpush1.bf16.msra.mxu0 %v468
    %1359 = vmatprep.subr.bf16.mxu0 %v473
    %1360 = vmatpush1.bf16.msra.mxu0 %v472
    %1361 = vmatprep.subr.bf16.mxu0 %v477
    %1362 = vmatpush1.bf16.msra.mxu0 %v476
    %1363 = vmatprep.subr.bf16.mxu0 %v481
    %1364 = vmatpush1.bf16.msra.mxu0 %v480
    %1365 = vmatprep.subr.bf16.mxu0 0
    %1366 = vmatpush1.bf16.msra.mxu0 0
    %1367 = vmatprep.subr.bf16.mxu0 0
    %1368 = vmatpush1.bf16.msra.mxu0 0
    %1369 = vmatprep.subr.bf16.mxu0 0
    %1370 = vmatpush1.bf16.msra.mxu0 0
    %1371 = vmatprep.subr.bf16.mxu0 0
    %1372 = vmatpush1.bf16.msra.mxu0 0
    %1373 = vmatprep.subr.bf16.mxu0 0
    %1374 = vmatpush1.bf16.msra.mxu0 0
    %1375 = vmatprep.subr.bf16.mxu0 0
    %1376 = vmatpush1.bf16.msra.mxu0 0
    %1377 = vmatprep.subr.bf16.mxu0 0
    %1378 = vmatpush1.bf16.msra.mxu0 0
    %1379 = vmatprep.subr.bf16.mxu0 0
    %1380 = vmatpush1.bf16.msra.mxu0 0
    %1381 = vmatprep.mubr.bf16.mxu0 0
    %1382 = vmatmul.mubr.bf16.gmra.mrb[0].mxu0 %v1348
    %v1383 = vpop.f32.mrb[0].mxu0
    %v1384 = vadd.f32 0.0, %v1383
    %v1385 = vpop.f32.mrb[0].mxu0
    %v1386 = vadd.f32 0.0, %v1385
    %v1387 = vpop.f32.mrb[0].mxu0
    %v1388 = vpop.f32.mrb[0].mxu0
    %1389 = vdwg.mxu0
    %1390 = vmatprep.subr.bf16.mxu0 %v455
    %1391 = vmatpush1.bf16.msra.mxu0 %v454
    %1392 = vmatprep.subr.bf16.mxu0 %v459
    %1393 = vmatpush1.bf16.msra.mxu0 %v458
    %1394 = vmatprep.subr.bf16.mxu0 %v463
    %1395 = vmatpush1.bf16.msra.mxu0 %v462
    %1396 = vmatprep.subr.bf16.mxu0 %v467
    %1397 = vmatpush1.bf16.msra.mxu0 %v466
    %1398 = vmatprep.subr.bf16.mxu0 %v471
    %1399 = vmatpush1.bf16.msra.mxu0 %v470
    %1400 = vmatprep.subr.bf16.mxu0 %v475
    %1401 = vmatpush1.bf16.msra.mxu0 %v474
    %1402 = vmatprep.subr.bf16.mxu0 %v479
    %1403 = vmatpush1.bf16.msra.mxu0 %v478
    %1404 = vmatprep.subr.bf16.mxu0 %v483
    %1405 = vmatpush1.bf16.msra.mxu0 %v482
    %1406 = vmatprep.subr.bf16.mxu0 0
    %1407 = vmatpush1.bf16.msra.mxu0 0
    %1408 = vmatprep.subr.bf16.mxu0 0
    %1409 = vmatpush1.bf16.msra.mxu0 0
    %1410 = vmatprep.subr.bf16.mxu0 0
    %1411 = vmatpush1.bf16.msra.mxu0 0
    %1412 = vmatprep.subr.bf16.mxu0 0
    %1413 = vmatpush1.bf16.msra.mxu0 0
    %1414 = vmatprep.subr.bf16.mxu0 0
    %1415 = vmatpush1.bf16.msra.mxu0 0
    %1416 = vmatprep.subr.bf16.mxu0 0
    %1417 = vmatpush1.bf16.msra.mxu0 0
    %1418 = vmatprep.subr.bf16.mxu0 0
    %1419 = vmatpush1.bf16.msra.mxu0 0
    %1420 = vmatprep.subr.bf16.mxu0 0
    %1421 = vmatpush1.bf16.msra.mxu0 0
    %1422 = vmatprep.mubr.bf16.mxu0 0
    %1423 = vmatmul.mubr.bf16.gmra.mrb[0].mxu0 %v1348
    %v1424 = vpop.f32.mrb[0].mxu0
    %v1425 = vadd.f32 0.0, %v1424
    %v1426 = vpop.f32.mrb[0].mxu0
    %v1427 = vadd.f32 0.0, %v1426
    %v1428 = vpop.f32.mrb[0].mxu0
    %v1429 = vpop.f32.mrb[0].mxu0
    %1430 = vdwg.mxu0
    %v1431 = vadd.f32 %v1344, %v1384
    %v1432 = vadd.f32 %v1345, %v1386
    %v1433 = vadd.f32 %v1346, %v1425
    %v1434 = vadd.f32 %v1347, %v1427
    %v1435 = vxor.u32 %v1431, 2147483648
    %v1436 = vxor.u32 %v1432, 2147483648
    %v1437 = vxor.u32 %v1433, 2147483648
    %v1438 = vmul.f32 %v1435, 1.442695
    %v1439 = vpow.pop %v1438
    %v1440 = vmul.f32 %v1436, 1.442695
    %v1441 = vpow.pop %v1440
    %v1442 = vmul.f32 %v1437, 1.442695
    %v1443 = vpow.pop %v1442
    %v1444 = vadd.f32 %v1439, 1.0
    %v1445 = vadd.f32 %v1441, 1.0
    %v1446 = vadd.f32 %v1443, 1.0
    %v1447 = vrcp.pop %v1444
    %v1448 = vmul.f32 1.0, %v1447
    %v1449 = vrcp.pop %v1445
    %v1450 = vmul.f32 1.0, %v1449
    %v1451 = vrcp.pop %v1446
    %v1452 = vmul.f32 1.0, %v1451
    %v1453 = vtanh.pop %v1434
    %v1454 = vmul.f32 %v1450, %v1337
    %v1455 = vmul.f32 %v1448, %v1453
    %v1456 = vadd.f32 %v1454, %v1455
    %v1457 = vtanh.pop %v1456
    %v1458 = vmul.f32 %v1452, %v1457
    %v1459 = vadd.f32 %v1340, %v1458
    %1460 = vst [vmem:[#allocation3] sm:$0xff] %v1458
    %1461 = vst [vmem:[#allocation4] sm:$0xff] %v1456
    %1462 = vst [vmem:[#allocation5] sm:$0xff] %v1459
    // Predicated region
    $region26: #{tpu_custom_call.1} parent=1 // pred_check
      %p1463 = pneg %p33
    $region27: #{tpu_custom_call.1} parent=1 // pred_check_branch
      %1465 = sbr.rel (%p1463) target = $region29
    $region28: #{tpu_custom_call.1} parent=1 // pred_region
      %v1466 = vld [vmem:[#allocation5] sm:$0xff]
      %v1467 = vmul.f32 %v1466, 0.125
      %1468 = vst [vmem:[#allocation9] sm:$0xff] %v1467
    $region29: #{tpu_custom_call.1} parent=1 // pred_fallthru
      _
    // Predicated region
    $region30: #{tpu_custom_call.1} parent=1 // pred_check
      _
    $region31: #{tpu_custom_call.1} parent=1 // pred_check_branch
      %1470 = sbr.rel (0) target = $region33
    $region32: #{tpu_custom_call.1} parent=1 // pred_region
      %s1472 = ssub.s32 128, 128
      %1473 = vsyncadd [#allocation8], %s1472
      %s1475 = sshll.u32 [#allocation9], 4
      %s1476 = int_to_ptr.vmem [resolvable:$true] %s1475
      %1478 = dma.vmem_to_hbm [thread:$0]  %s1476, 128, %s4, [#allocation8]
    $region33: #{tpu_custom_call.1} parent=1 // pred_fallthru
      _
    // Predicated region
    $region34: #{tpu_custom_call.1} parent=1 // pred_check
      _
    $region35: #{tpu_custom_call.1} parent=1 // pred_check_branch
      %1480 = sbr.rel (0) target = $region37
    $region36: #{tpu_custom_call.1} parent=1 // pred_region
      %1481 = dma.done [#allocation8], 128
    $region37: #{tpu_custom_call.1} parent=1 // pred_fallthru
      _
    %1482 = vsyncpa [#allocation7], 1
    %1483 = vsyncpa [#allocation8], 1

</llo_original>
